<compile_context>
chip_gen: v7x
topology: tpu7x:2x2x1
jax: 0.10.0
libtpu: 0.0.40
codegen_flags: <defaults>
</compile_context>

<pallas_src>
import functools

import numpy as np

import jax
import jax.numpy as jnp
from jax.experimental import pallas as pl
from jax.experimental.pallas import tpu as pltpu


def _round_up(n: int, m: int) -> int:
    return ((n + m - 1) // m) * m


def _choose_tiling(batch: int, batch_tile: int, acc_lanes: int, compute_dtype):
    """Pick (TB, chunk).

    TB    = rows per grid step (DMA tile).
    chunk = rows processed per inner iteration, sized so the running-max
            accumulator stays around 8 vregs (review item: bound vreg live
            range of the hot loop).  Also caps the tile at ceil(B/2) so the
            grid has >= 2 parallel steps (both v7x TensorCores get work).
    """
    sublanes_per_vreg = 16 if np.dtype(compute_dtype).itemsize == 2 else 8
    chunk = (8 * sublanes_per_vreg * 128) // max(acc_lanes, 128)
    chunk = max(8, (chunk // 8) * 8)
    half_batch = max(8, _round_up((batch + 1) // 2, 8))
    bt = _round_up(max(batch_tile, 8), 8)
    chunk = min(chunk, bt, half_batch, _round_up(batch, 8))
    n_chunks = max(1, min(bt // chunk, half_batch // chunk))
    return chunk * n_chunks, chunk


# ----------------------------------------------------------------------------
# Kernels
# ----------------------------------------------------------------------------


def _denmo_fused_kernel(x_ref, sign_ref, trop_ref, w_ref, b_ref, out_ref, *,
                        chunk, compute_dtype):
    """One signed accumulator over all E+D columns (general E/D)."""
    TB, F = x_ref.shape            # trop_ref has F+1 rows (last = bias feature)
    C = trop_ref.shape[1]
    cd = compute_dtype
    n_chunks = TB // chunk

    # Hoisted once per grid step: JAX does not CSE broadcast_in_dim, so doing
    # these inside the feature loop would re-broadcast them F times.
    sign_b = jnp.broadcast_to(sign_ref[...].astype(cd), (chunk, C))
    # The appended zero "bias" feature contributes sign*0 + trop[F, :], so the
    # accumulator is initialised from the last tropical row (the bias column of
    # the input is never materialised).
    init = jnp.broadcast_to(trop_ref[F:F + 1, :].astype(cd), (chunk, C))

    def process_rows(r0):
        x = x_ref[pl.ds(r0, chunk), :].astype(cd)          # (chunk, F)
        acc = init
        # Running max over features: pure 2-D VPU work, no (chunk, F+1, C)
        # intermediate and no axis-1 reduction.
        for f in range(F):
            acc = jnp.maximum(
                acc, x[:, f:f + 1] * sign_b + trop_ref[f:f + 1, :].astype(cd))
        # No `acc * sign` pass: the per-column sign was folded into w_ref on the
        # host, so the signed accumulator feeds the MXU directly.
        y = jnp.dot(acc, w_ref[...].astype(cd),
                    preferred_element_type=jnp.float32)
        out_ref[pl.ds(r0, chunk), :] = (y + b_ref[...]).astype(out_ref.dtype)

    if n_chunks == 1:
        process_rows(0)
    else:
        # fori_loop (not a static Python loop) bounds the accumulator's vreg
        # live range to one chunk while keeping a large DMA tile.
        def body(c, carry):
            process_rows(pl.multiple_of(c * chunk, 8))
            return carry
        jax.lax.fori_loop(0, n_chunks, body, 0)


def _denmo_split_kernel(x_ref, dil_ref, ero_ref, wd_ref, we_ref, b_ref, out_ref,
                        *, chunk, compute_dtype):
    """Two accumulators (max for dilation, min for erosion): 2 VALU ops/element,
    no per-feature sign multiply.  Used when E and D are multiples of 128."""
    TB, F = x_ref.shape
    D = dil_ref.shape[1]
    E = ero_ref.shape[1]
    cd = compute_dtype
    n_chunks = TB // chunk

    # Bias-feature init rows (the appended feature is 0).
    init_d = jnp.broadcast_to(dil_ref[F:F + 1, :].astype(cd), (chunk, D))
    init_e = jnp.broadcast_to(-ero_ref[F:F + 1, :].astype(cd), (chunk, E))

    def process_rows(r0):
        x = x_ref[pl.ds(r0, chunk), :].astype(cd)
        acc_d, acc_e = init_d, init_e
        for f in range(F):
            # One explicit lane-broadcast of the x column, shared by both
            # accumulators when the shapes match.
            xb_d = jnp.broadcast_to(x[:, f:f + 1], (chunk, D))
            xb_e = xb_d if D == E else jnp.broadcast_to(x[:, f:f + 1], (chunk, E))
            acc_d = jnp.maximum(acc_d, xb_d + dil_ref[f:f + 1, :].astype(cd))
            acc_e = jnp.minimum(acc_e, xb_e - ero_ref[f:f + 1, :].astype(cd))
        y = jnp.dot(acc_e, we_ref[...].astype(cd),
                    preferred_element_type=jnp.float32)
        y = y + jnp.dot(acc_d, wd_ref[...].astype(cd),
                        preferred_element_type=jnp.float32)
        out_ref[pl.ds(r0, chunk), :] = (y + b_ref[...]).astype(out_ref.dtype)

    if n_chunks == 1:
        process_rows(0)
    else:
        def body(c, carry):
            process_rows(pl.multiple_of(c * chunk, 8))
            return carry
        jax.lax.fori_loop(0, n_chunks, body, 0)


# ----------------------------------------------------------------------------
# Host wrapper
# ----------------------------------------------------------------------------


def denmo_forward(x, dilations, erosions, w, b, *, batch_tile=128,
                  compute_dtype=jnp.float32, return_padded=False):
    """Pallas forward pass for DenMoNet.

    Args:
      x:         (B, ...) input; flattened row-major to (B, in_features).
      dilations: (in_features + 1, num_dilations)
      erosions:  (in_features + 1, num_erosions)
      w:         (num_erosions + num_dilations, output_dim)  == torch Linear.weight.T
      b:         (output_dim,)
      batch_tile: max rows per grid step (rounded/capped internally).
      compute_dtype: jnp.float32 (exact) or jnp.bfloat16 (v6e/v7x fast path).
      return_padded: if True, return the lane-dense (B_pad, O_pad) output and
        skip the extra XLA slice copy (useful when this feeds a larger model).
    Returns:
      (B, output_dim) float32 (or the padded buffer if return_padded).
    """
    B = x.shape[0]
    xf = x.reshape(B, -1).astype(jnp.float32)
    F = xf.shape[1]
    Fp1, D = dilations.shape
    E = erosions.shape[1]
    O = w.shape[1]
    assert Fp1 == F + 1 and erosions.shape[0] == Fp1
    assert w.shape[0] == E + D and E + D > 0 and b.shape == (O,)

    O_pad = max(128, _round_up(O, 128))
    b_pad = jnp.zeros((1, O_pad), jnp.float32).at[:, :O].set(
        b.astype(jnp.float32))

    # Split-accumulator path only when it does not waste lanes (E, D already
    # lane-aligned); otherwise the fused single-accumulator form is cheaper for
    # small E/D (e.g. 32+32 packs into one 128-lane accumulator).
    use_split = (E > 0 and D > 0 and E % 128 == 0 and D % 128 == 0)

    if use_split:
        acc_lanes = E + D
        TB, chunk = _choose_tiling(B, batch_tile, acc_lanes, compute_dtype)
        dil = dilations.astype(jnp.float32)
        ero = erosions.astype(jnp.float32)
        # Rows of W: [eroded | dilated]; pad only the output columns.
        we = jnp.zeros((E, O_pad), jnp.float32).at[:, :O].set(
            w[:E].astype(jnp.float32))
        wd = jnp.zeros((D, O_pad), jnp.float32).at[:, :O].set(
            w[E:].astype(jnp.float32))
        kernel = functools.partial(_denmo_split_kernel, chunk=chunk,
                                   compute_dtype=compute_dtype)
        operands = [dil, ero, wd, we, b_pad]
        const_specs = [
            pl.BlockSpec((Fp1, D), lambda i: (0, 0)),
            pl.BlockSpec((Fp1, E), lambda i: (0, 0)),
            pl.BlockSpec((D, O_pad), lambda i: (0, 0)),
            pl.BlockSpec((E, O_pad), lambda i: (0, 0)),
            pl.BlockSpec((1, O_pad), lambda i: (0, 0)),
        ]
        param_bytes = 4 * (2 * Fp1 * (D + E) // 2 + (D + E) * O_pad + O_pad
                           + Fp1 * (D + E))
        flops_per_row = 2 * Fp1 * (D + E) + 2 * (D + E) * O_pad + O_pad
    else:
        C = E + D
        C_pad = max(128, _round_up(C, 128))
        acc_lanes = C_pad
        TB, chunk = _choose_tiling(B, batch_tile, acc_lanes, compute_dtype)
        # Fused tropical weights, columns ordered [erosions | dilations | 0-pad]
        # (matches the reference concat([eroded, dilated]) and the rows of W).
        trop = jnp.zeros((Fp1, C_pad), jnp.float32)
        trop = trop.at[:, :E].set(erosions.astype(jnp.float32))
        trop = trop.at[:, E:C].set(dilations.astype(jnp.float32))
        # Per-column sign: -1 for erosion columns (min via -max(-x+e)).
        sign = jnp.ones((1, C_pad), jnp.float32).at[:, :E].set(-1.0)
        # Fold the final `acc * sign` pass into the linear weights:
        #   (acc * sign) @ W == acc @ (sign[:, None] * W).
        row_sign = jnp.concatenate(
            [-jnp.ones((E, 1), jnp.float32), jnp.ones((D, 1), jnp.float32)],
            axis=0)
        w_signed = jnp.zeros((C_pad, O_pad), jnp.float32).at[:C, :O].set(
            row_sign * w.astype(jnp.float32))
        kernel = functools.partial(_denmo_fused_kernel, chunk=chunk,
                                   compute_dtype=compute_dtype)
        operands = [sign, trop, w_signed, b_pad]
        const_specs = [
            pl.BlockSpec((1, C_pad), lambda i: (0, 0)),
            pl.BlockSpec((Fp1, C_pad), lambda i: (0, 0)),
            pl.BlockSpec((C_pad, O_pad), lambda i: (0, 0)),
            pl.BlockSpec((1, O_pad), lambda i: (0, 0)),
        ]
        param_bytes = 4 * (C_pad + Fp1 * C_pad + C_pad * O_pad + O_pad)
        flops_per_row = 3 * Fp1 * C_pad + 2 * C_pad * O_pad + O_pad

    # Batch padding so TB divides B; padded rows are finite garbage, sliced off.
    B_pad = _round_up(B, TB)
    if B_pad != B:
        xf = jnp.concatenate(
            [xf, jnp.zeros((B_pad - B, F), jnp.float32)], axis=0)
    grid = (B_pad // TB,)

    # Tight VMEM accounting (review item): double-buffered x/out tiles,
    # double-buffered constants (default pipeline), plus broadcast/temp
    # headroom for one chunk.  Clamped to 48 MiB for v7x's 64 MiB VMEM.
    io_bytes = 4 * TB * (F + O_pad)
    temp_bytes = 16 * chunk * acc_lanes
    need = 2 * io_bytes + 2 * param_bytes + temp_bytes
    vmem_limit_bytes = min(max(int(need * 1.25), 16 * 1024 * 1024),
                           48 * 1024 * 1024)

    cost = pl.CostEstimate(
        flops=int(B_pad * flops_per_row),
        transcendentals=0,
        bytes_accessed=int(4 * B_pad * (F + O_pad) + param_bytes),
    )

    out_pad = pl.pallas_call(
        kernel,
        out_shape=jax.ShapeDtypeStruct((B_pad, O_pad), jnp.float32),
        grid_spec=pltpu.PrefetchScalarGridSpec(
            num_scalar_prefetch=0,
            grid=grid,
            in_specs=[pl.BlockSpec((TB, F), lambda i: (i, 0))] + const_specs,
            out_specs=pl.BlockSpec((TB, O_pad), lambda i: (i, 0)),
        ),
        compiler_params=pltpu.CompilerParams(
            dimension_semantics=("parallel",),
            vmem_limit_bytes=vmem_limit_bytes,
        ),
        cost_estimate=cost,
    )(xf, *operands)

    if return_padded:
        return out_pad
    return out_pad[:B, :O]


# ----------------------------------------------------------------------------
# Pure-JAX reference + demo
# ----------------------------------------------------------------------------


def denmo_reference(x, dilations, erosions, w, b):
    """Pure-JAX reference matching the PyTorch forward exactly."""
    B = x.shape[0]
    xf = x.reshape(B, -1).astype(jnp.float32)
    xp = jnp.concatenate([xf, jnp.zeros((B, 1), jnp.float32)], axis=1)
    dilated = jnp.max(xp[:, :, None] + dilations[None, :, :], axis=1)
    eroded = jnp.min(xp[:, :, None] - erosions[None, :, :], axis=1)
    combined = jnp.concatenate([eroded, dilated], axis=1)
    return combined @ w + b[None, :]


def xavier_uniform(key, shape):
    # torch.nn.init.xavier_uniform_ for a 2D tensor (symmetric in fan_in/out).
    fan_a, fan_b = shape
    bound = (6.0 / (fan_a + fan_b)) ** 0.5
    return jax.random.uniform(key, shape, jnp.float32, -bound, bound)


if __name__ == "__main__":
    key = jax.random.PRNGKey(0)
    keys = jax.random.split(key, 10)

    # ---- Config 1: fused-accumulator path, f32 (exact parity check). -------
    # batch 256 -> TB=128 with two 64-row inner chunks (exercises the
    # fori_loop chunking) and a 2-step parallel grid.
    batch, in_features = 256, 16            # x is (256, 1, 4, 4)
    n_dil, n_ero, out_dim = 32, 32, 10
    x = jax.random.normal(keys[0], (batch, 1, 4, 4), jnp.float32)
    dilations = xavier_uniform(keys[1], (in_features + 1, n_dil))
    erosions = xavier_uniform(keys[2], (in_features + 1, n_ero))
    lc_size = n_dil + n_ero
    lin_bound = 1.0 / (lc_size ** 0.5)      # torch Linear default init range
    w = jax.random.uniform(keys[3], (lc_size, out_dim), jnp.float32,
                           -lin_bound, lin_bound)
    b = jax.random.uniform(keys[4], (out_dim,), jnp.float32,
                           -lin_bound, lin_bound)

    out = jax.block_until_ready(
        denmo_forward(x, dilations, erosions, w, b, batch_tile=256))
    ref = denmo_reference(x, dilations, erosions, w, b)
    assert out.shape == (batch, out_dim)
    assert jnp.allclose(out, ref, atol=1e-4, rtol=1e-4), "fused f32 mismatch"

    # ---- Config 2: split-accumulator path (E, D multiples of 128), f32. ----
    b2_n, f2, d2, e2, o2 = 64, 8, 128, 128, 16
    x2 = jax.random.normal(keys[5], (b2_n, f2), jnp.float32)
    dil2 = xavier_uniform(keys[6], (f2 + 1, d2))
    ero2 = xavier_uniform(keys[7], (f2 + 1, e2))
    lb2 = 1.0 / ((d2 + e2) ** 0.5)
    w2 = jax.random.uniform(keys[8], (d2 + e2, o2), jnp.float32, -lb2, lb2)
    b2 = jax.random.uniform(keys[9], (o2,), jnp.float32, -lb2, lb2)
    out2 = jax.block_until_ready(
        denmo_forward(x2, dil2, ero2, w2, b2, batch_tile=32))
    ref2 = denmo_reference(x2, dil2, ero2, w2, b2)
    assert out2.shape == (b2_n, o2)
    assert jnp.allclose(out2, ref2, atol=2e-4, rtol=2e-4), "split path mismatch"

    # ---- Config 3 (v6e / v7x only): bf16 tropical pass, looser tolerance. ---
    # v5e and older have no bf16 VALU, so they keep the exact f32 path.
    kind = jax.devices()[0].device_kind.lower()
    if not any(gen in kind for gen in ("v2", "v3", "v4", "v5")):
        out_bf = jax.block_until_ready(
            denmo_forward(x, dilations, erosions, w, b, batch_tile=256,
                          compute_dtype=jnp.bfloat16))
        err = float(jnp.max(jnp.abs(out_bf - ref)))
        assert err < 0.25, f"bf16 path error too large: {err}"

    print("KERNEL_OK")
</pallas_src>

<mosaic_0001>
module attributes {stable_mosaic.version = 11 : i64} {
  func.func @_denmo_fused_kernel(%arg0: i32, %arg1: memref<128x16xf32, #tpu.memory_space<vmem>>, %arg2: memref<1x128xf32, #tpu.memory_space<vmem>>, %arg3: memref<17x128xf32, #tpu.memory_space<vmem>>, %arg4: memref<128x128xf32, #tpu.memory_space<vmem>>, %arg5: memref<1x128xf32, #tpu.memory_space<vmem>>, %arg6: memref<128x128xf32, #tpu.memory_space<vmem>>) attributes {dimension_semantics = [#tpu.dimension_semantics<parallel>], iteration_bounds = array<i64: 2>, scalar_prefetch = 0 : i64, scratch_operands = 0 : i64, tpu.core_type = #tpu.core_type<tc>, window_params = [{transform_indices = @transform_0, window_bounds = array<i64: 128, 16>}, {pipeline_mode = #tpu.pipeline_mode<synchronous>, transform_indices = @transform_1, window_bounds = array<i64: 1, 128>}, {pipeline_mode = #tpu.pipeline_mode<synchronous>, transform_indices = @transform_2, window_bounds = array<i64: 17, 128>}, {pipeline_mode = #tpu.pipeline_mode<synchronous>, transform_indices = @transform_3, window_bounds = array<i64: 128, 128>}, {pipeline_mode = #tpu.pipeline_mode<synchronous>, transform_indices = @transform_4, window_bounds = array<i64: 1, 128>}, {transform_indices = @transform_5, window_bounds = array<i64: 128, 128>}]} {
    %c0 = arith.constant 0 : index
    %c0_0 = arith.constant 0 : index
    %0 = vector.load %arg2[%c0, %c0_0] : memref<1x128xf32, #tpu.memory_space<vmem>>, vector<1x128xf32>
    %1 = vector.shape_cast %0 : vector<1x128xf32> to vector<1x128xf32>
    %2 = vector.broadcast %1 : vector<1x128xf32> to vector<64x128xf32>
    %c16 = arith.constant 16 : index
    %c0_1 = arith.constant 0 : index
    %3 = vector.load %arg3[%c16, %c0_1] : memref<17x128xf32, #tpu.memory_space<vmem>>, vector<1x128xf32>
    %4 = vector.shape_cast %3 : vector<1x128xf32> to vector<1x128xf32>
    %5 = vector.broadcast %4 : vector<1x128xf32> to vector<64x128xf32>
    %c0_i32 = arith.constant 0 : i32
    %c2_i32 = arith.constant 2 : i32
    %6 = arith.addi %c0_i32, %c2_i32 : i32
    %c1_i32 = arith.constant 1 : i32
    scf.for %arg7 = %c0_i32 to %6 step %c1_i32  : i32 {
      %c64_i32 = arith.constant 64 : i32
      %7 = arith.muli %arg7, %c64_i32 : i32
      %8 = tpu.assume_multiple %7, 8 : i32
      %9 = arith.index_cast %8 : i32 to index
      %c0_3 = arith.constant 0 : index
      %10 = vector.load %arg1[%9, %c0_3] : memref<128x16xf32, #tpu.memory_space<vmem>>, vector<64x16xf32>
      %11 = vector.extract_strided_slice %10 {offsets = [0, 0], sizes = [64, 1], strides = [1, 1]} : vector<64x16xf32> to vector<64x1xf32>
      %12 = vector.broadcast %11 : vector<64x1xf32> to vector<64x128xf32>
      %13 = arith.mulf %12, %2 : vector<64x128xf32>
      %c0_4 = arith.constant 0 : index
      %c0_5 = arith.constant 0 : index
      %14 = vector.load %arg3[%c0_4, %c0_5] : memref<17x128xf32, #tpu.memory_space<vmem>>, vector<1x128xf32>
      %15 = vector.broadcast %14 : vector<1x128xf32> to vector<64x128xf32>
      %16 = arith.addf %13, %15 : vector<64x128xf32>
      %17 = arith.maximumf %5, %16 : vector<64x128xf32>
      %18 = vector.extract_strided_slice %10 {offsets = [0, 1], sizes = [64, 1], strides = [1, 1]} : vector<64x16xf32> to vector<64x1xf32>
      %19 = vector.broadcast %18 : vector<64x1xf32> to vector<64x128xf32>
      %20 = arith.mulf %19, %2 : vector<64x128xf32>
      %c1 = arith.constant 1 : index
      %c0_6 = arith.constant 0 : index
      %21 = vector.load %arg3[%c1, %c0_6] : memref<17x128xf32, #tpu.memory_space<vmem>>, vector<1x128xf32>
      %22 = vector.broadcast %21 : vector<1x128xf32> to vector<64x128xf32>
      %23 = arith.addf %20, %22 : vector<64x128xf32>
      %24 = arith.maximumf %17, %23 : vector<64x128xf32>
      %25 = vector.extract_strided_slice %10 {offsets = [0, 2], sizes = [64, 1], strides = [1, 1]} : vector<64x16xf32> to vector<64x1xf32>
      %26 = vector.broadcast %25 : vector<64x1xf32> to vector<64x128xf32>
      %27 = arith.mulf %26, %2 : vector<64x128xf32>
      %c2 = arith.constant 2 : index
      %c0_7 = arith.constant 0 : index
      %28 = vector.load %arg3[%c2, %c0_7] : memref<17x128xf32, #tpu.memory_space<vmem>>, vector<1x128xf32>
      %29 = vector.broadcast %28 : vector<1x128xf32> to vector<64x128xf32>
      %30 = arith.addf %27, %29 : vector<64x128xf32>
      %31 = arith.maximumf %24, %30 : vector<64x128xf32>
      %32 = vector.extract_strided_slice %10 {offsets = [0, 3], sizes = [64, 1], strides = [1, 1]} : vector<64x16xf32> to vector<64x1xf32>
      %33 = vector.broadcast %32 : vector<64x1xf32> to vector<64x128xf32>
      %34 = arith.mulf %33, %2 : vector<64x128xf32>
      %c3 = arith.constant 3 : index
      %c0_8 = arith.constant 0 : index
      %35 = vector.load %arg3[%c3, %c0_8] : memref<17x128xf32, #tpu.memory_space<vmem>>, vector<1x128xf32>
      %36 = vector.broadcast %35 : vector<1x128xf32> to vector<64x128xf32>
      %37 = arith.addf %34, %36 : vector<64x128xf32>
      %38 = arith.maximumf %31, %37 : vector<64x128xf32>
      %39 = vector.extract_strided_slice %10 {offsets = [0, 4], sizes = [64, 1], strides = [1, 1]} : vector<64x16xf32> to vector<64x1xf32>
      %40 = vector.broadcast %39 : vector<64x1xf32> to vector<64x128xf32>
      %41 = arith.mulf %40, %2 : vector<64x128xf32>
      %c4 = arith.constant 4 : index
      %c0_9 = arith.constant 0 : index
      %42 = vector.load %arg3[%c4, %c0_9] : memref<17x128xf32, #tpu.memory_space<vmem>>, vector<1x128xf32>
      %43 = vector.broadcast %42 : vector<1x128xf32> to vector<64x128xf32>
      %44 = arith.addf %41, %43 : vector<64x128xf32>
      %45 = arith.maximumf %38, %44 : vector<64x128xf32>
      %46 = vector.extract_strided_slice %10 {offsets = [0, 5], sizes = [64, 1], strides = [1, 1]} : vector<64x16xf32> to vector<64x1xf32>
      %47 = vector.broadcast %46 : vector<64x1xf32> to vector<64x128xf32>
      %48 = arith.mulf %47, %2 : vector<64x128xf32>
      %c5 = arith.constant 5 : index
      %c0_10 = arith.constant 0 : index
      %49 = vector.load %arg3[%c5, %c0_10] : memref<17x128xf32, #tpu.memory_space<vmem>>, vector<1x128xf32>
      %50 = vector.broadcast %49 : vector<1x128xf32> to vector<64x128xf32>
      %51 = arith.addf %48, %50 : vector<64x128xf32>
      %52 = arith.maximumf %45, %51 : vector<64x128xf32>
      %53 = vector.extract_strided_slice %10 {offsets = [0, 6], sizes = [64, 1], strides = [1, 1]} : vector<64x16xf32> to vector<64x1xf32>
      %54 = vector.broadcast %53 : vector<64x1xf32> to vector<64x128xf32>
      %55 = arith.mulf %54, %2 : vector<64x128xf32>
      %c6 = arith.constant 6 : index
      %c0_11 = arith.constant 0 : index
      %56 = vector.load %arg3[%c6, %c0_11] : memref<17x128xf32, #tpu.memory_space<vmem>>, vector<1x128xf32>
      %57 = vector.broadcast %56 : vector<1x128xf32> to vector<64x128xf32>
      %58 = arith.addf %55, %57 : vector<64x128xf32>
      %59 = arith.maximumf %52, %58 : vector<64x128xf32>
      %60 = vector.extract_strided_slice %10 {offsets = [0, 7], sizes = [64, 1], strides = [1, 1]} : vector<64x16xf32> to vector<64x1xf32>
      %61 = vector.broadcast %60 : vector<64x1xf32> to vector<64x128xf32>
      %62 = arith.mulf %61, %2 : vector<64x128xf32>
      %c7 = arith.constant 7 : index
      %c0_12 = arith.constant 0 : index
      %63 = vector.load %arg3[%c7, %c0_12] : memref<17x128xf32, #tpu.memory_space<vmem>>, vector<1x128xf32>
      %64 = vector.broadcast %63 : vector<1x128xf32> to vector<64x128xf32>
      %65 = arith.addf %62, %64 : vector<64x128xf32>
      %66 = arith.maximumf %59, %65 : vector<64x128xf32>
      %67 = vector.extract_strided_slice %10 {offsets = [0, 8], sizes = [64, 1], strides = [1, 1]} : vector<64x16xf32> to vector<64x1xf32>
      %68 = vector.broadcast %67 : vector<64x1xf32> to vector<64x128xf32>
      %69 = arith.mulf %68, %2 : vector<64x128xf32>
      %c8 = arith.constant 8 : index
      %c0_13 = arith.constant 0 : index
      %70 = vector.load %arg3[%c8, %c0_13] : memref<17x128xf32, #tpu.memory_space<vmem>>, vector<1x128xf32>
      %71 = vector.broadcast %70 : vector<1x128xf32> to vector<64x128xf32>
      %72 = arith.addf %69, %71 : vector<64x128xf32>
      %73 = arith.maximumf %66, %72 : vector<64x128xf32>
      %74 = vector.extract_strided_slice %10 {offsets = [0, 9], sizes = [64, 1], strides = [1, 1]} : vector<64x16xf32> to vector<64x1xf32>
      %75 = vector.broadcast %74 : vector<64x1xf32> to vector<64x128xf32>
      %76 = arith.mulf %75, %2 : vector<64x128xf32>
      %c9 = arith.constant 9 : index
      %c0_14 = arith.constant 0 : index
      %77 = vector.load %arg3[%c9, %c0_14] : memref<17x128xf32, #tpu.memory_space<vmem>>, vector<1x128xf32>
      %78 = vector.broadcast %77 : vector<1x128xf32> to vector<64x128xf32>
      %79 = arith.addf %76, %78 : vector<64x128xf32>
      %80 = arith.maximumf %73, %79 : vector<64x128xf32>
      %81 = vector.extract_strided_slice %10 {offsets = [0, 10], sizes = [64, 1], strides = [1, 1]} : vector<64x16xf32> to vector<64x1xf32>
      %82 = vector.broadcast %81 : vector<64x1xf32> to vector<64x128xf32>
      %83 = arith.mulf %82, %2 : vector<64x128xf32>
      %c10 = arith.constant 10 : index
      %c0_15 = arith.constant 0 : index
      %84 = vector.load %arg3[%c10, %c0_15] : memref<17x128xf32, #tpu.memory_space<vmem>>, vector<1x128xf32>
      %85 = vector.broadcast %84 : vector<1x128xf32> to vector<64x128xf32>
      %86 = arith.addf %83, %85 : vector<64x128xf32>
      %87 = arith.maximumf %80, %86 : vector<64x128xf32>
      %88 = vector.extract_strided_slice %10 {offsets = [0, 11], sizes = [64, 1], strides = [1, 1]} : vector<64x16xf32> to vector<64x1xf32>
      %89 = vector.broadcast %88 : vector<64x1xf32> to vector<64x128xf32>
      %90 = arith.mulf %89, %2 : vector<64x128xf32>
      %c11 = arith.constant 11 : index
      %c0_16 = arith.constant 0 : index
      %91 = vector.load %arg3[%c11, %c0_16] : memref<17x128xf32, #tpu.memory_space<vmem>>, vector<1x128xf32>
      %92 = vector.broadcast %91 : vector<1x128xf32> to vector<64x128xf32>
      %93 = arith.addf %90, %92 : vector<64x128xf32>
      %94 = arith.maximumf %87, %93 : vector<64x128xf32>
      %95 = vector.extract_strided_slice %10 {offsets = [0, 12], sizes = [64, 1], strides = [1, 1]} : vector<64x16xf32> to vector<64x1xf32>
      %96 = vector.broadcast %95 : vector<64x1xf32> to vector<64x128xf32>
      %97 = arith.mulf %96, %2 : vector<64x128xf32>
      %c12 = arith.constant 12 : index
      %c0_17 = arith.constant 0 : index
      %98 = vector.load %arg3[%c12, %c0_17] : memref<17x128xf32, #tpu.memory_space<vmem>>, vector<1x128xf32>
      %99 = vector.broadcast %98 : vector<1x128xf32> to vector<64x128xf32>
      %100 = arith.addf %97, %99 : vector<64x128xf32>
      %101 = arith.maximumf %94, %100 : vector<64x128xf32>
      %102 = vector.extract_strided_slice %10 {offsets = [0, 13], sizes = [64, 1], strides = [1, 1]} : vector<64x16xf32> to vector<64x1xf32>
      %103 = vector.broadcast %102 : vector<64x1xf32> to vector<64x128xf32>
      %104 = arith.mulf %103, %2 : vector<64x128xf32>
      %c13 = arith.constant 13 : index
      %c0_18 = arith.constant 0 : index
      %105 = vector.load %arg3[%c13, %c0_18] : memref<17x128xf32, #tpu.memory_space<vmem>>, vector<1x128xf32>
      %106 = vector.broadcast %105 : vector<1x128xf32> to vector<64x128xf32>
      %107 = arith.addf %104, %106 : vector<64x128xf32>
      %108 = arith.maximumf %101, %107 : vector<64x128xf32>
      %109 = vector.extract_strided_slice %10 {offsets = [0, 14], sizes = [64, 1], strides = [1, 1]} : vector<64x16xf32> to vector<64x1xf32>
      %110 = vector.broadcast %109 : vector<64x1xf32> to vector<64x128xf32>
      %111 = arith.mulf %110, %2 : vector<64x128xf32>
      %c14 = arith.constant 14 : index
      %c0_19 = arith.constant 0 : index
      %112 = vector.load %arg3[%c14, %c0_19] : memref<17x128xf32, #tpu.memory_space<vmem>>, vector<1x128xf32>
      %113 = vector.broadcast %112 : vector<1x128xf32> to vector<64x128xf32>
      %114 = arith.addf %111, %113 : vector<64x128xf32>
      %115 = arith.maximumf %108, %114 : vector<64x128xf32>
      %116 = vector.extract_strided_slice %10 {offsets = [0, 15], sizes = [64, 1], strides = [1, 1]} : vector<64x16xf32> to vector<64x1xf32>
      %117 = vector.broadcast %116 : vector<64x1xf32> to vector<64x128xf32>
      %118 = arith.mulf %117, %2 : vector<64x128xf32>
      %c15 = arith.constant 15 : index
      %c0_20 = arith.constant 0 : index
      %119 = vector.load %arg3[%c15, %c0_20] : memref<17x128xf32, #tpu.memory_space<vmem>>, vector<1x128xf32>
      %120 = vector.broadcast %119 : vector<1x128xf32> to vector<64x128xf32>
      %121 = arith.addf %118, %120 : vector<64x128xf32>
      %122 = arith.maximumf %115, %121 : vector<64x128xf32>
      %c0_21 = arith.constant 0 : index
      %c0_22 = arith.constant 0 : index
      %123 = vector.load %arg4[%c0_21, %c0_22] : memref<128x128xf32, #tpu.memory_space<vmem>>, vector<128x128xf32>
      %cst = arith.constant dense<0.000000e+00> : vector<64x128xf32>
      %124 = tpu.matmul %122, %123, %cst {dimension_numbers = #tpu.dot_dimension_numbers<[1], [0], [0], [1], [0, 0, 1, 1], [], []>} : vector<64x128xf32>, vector<128x128xf32>, vector<64x128xf32> -> vector<64x128xf32>
      %c0_23 = arith.constant 0 : index
      %c0_24 = arith.constant 0 : index
      %125 = vector.load %arg5[%c0_23, %c0_24] : memref<1x128xf32, #tpu.memory_space<vmem>>, vector<1x128xf32>
      %126 = vector.broadcast %125 : vector<1x128xf32> to vector<64x128xf32>
      %127 = arith.addf %124, %126 : vector<64x128xf32>
      %128 = arith.index_cast %8 : i32 to index
      %c0_25 = arith.constant 0 : index
      %129 = vector.load %arg6[%128, %c0_25] : memref<128x128xf32, #tpu.memory_space<vmem>>, vector<64x128xf32>
      tpu.vector_store %arg6[%128, %c0_25], %127 {strides = array<i32>} : memref<128x128xf32, #tpu.memory_space<vmem>>, vector<64x128xf32>,
    }
    %c2_i32_2 = arith.constant 2 : i32
    return
  }
  func.func @transform_0(%arg0: i32) -> (i32, i32) {
    %c0_i32 = arith.constant 0 : i32
    %c0_i32_0 = arith.constant 0 : i32
    return %arg0, %c0_i32 : i32, i32
  }
  func.func @transform_1(%arg0: i32) -> (i32, i32) {
    %c0_i32 = arith.constant 0 : i32
    %c0_i32_0 = arith.constant 0 : i32
    %c0_i32_1 = arith.constant 0 : i32
    return %c0_i32, %c0_i32_0 : i32, i32
  }
  func.func @transform_2(%arg0: i32) -> (i32, i32) {
    %c0_i32 = arith.constant 0 : i32
    %c0_i32_0 = arith.constant 0 : i32
    %c0_i32_1 = arith.constant 0 : i32
    return %c0_i32, %c0_i32_0 : i32, i32
  }
  func.func @transform_3(%arg0: i32) -> (i32, i32) {
    %c0_i32 = arith.constant 0 : i32
    %c0_i32_0 = arith.constant 0 : i32
    %c0_i32_1 = arith.constant 0 : i32
    return %c0_i32, %c0_i32_0 : i32, i32
  }
  func.func @transform_4(%arg0: i32) -> (i32, i32) {
    %c0_i32 = arith.constant 0 : i32
    %c0_i32_0 = arith.constant 0 : i32
    %c0_i32_1 = arith.constant 0 : i32
    return %c0_i32, %c0_i32_0 : i32, i32
  }
  func.func @transform_5(%arg0: i32) -> (i32, i32) {
    %c0_i32 = arith.constant 0 : i32
    %c0_i32_0 = arith.constant 0 : i32
    return %arg0, %c0_i32 : i32, i32
  }
}

</mosaic_0001>

<llo_original>
// kernel: tpu_custom_call.1
$region0: #{tpu_custom_call.1}
  #allocation0 [shape = 'u32[]', space=smem, size = 0x4, offset = 0x4, fixed_abs, tag = 'smem constant byte address 0x4 - core index']
  #allocation1 [shape = 'u32[144,128]{1,0:T(1,128)}', space=vmem, size = 0x12000, scoped, tag = 'internal scratch']
  %s0 = inlined_call_operand.vmem [shape: f32[256,16], index: 0, kind: input, shape index: {}]
  %s1 = inlined_call_operand.vmem [shape: f32[1,128], index: 1, kind: input, shape index: {}]
  %s2 = inlined_call_operand.vmem [shape: f32[17,128], index: 2, kind: input, shape index: {}]
  %s3 = inlined_call_operand.vmem [shape: f32[128,128], index: 3, kind: input, shape index: {}]
  %s4 = inlined_call_operand.vmem [shape: f32[1,128], index: 4, kind: input, shape index: {}]
  %s5 = inlined_call_operand.hbm [shape: f32[256,128], index: 5, kind: output, shape index: {}]
  %s6 = sld [smem:[#allocation0]]
  $region60: #{tpu_custom_call.1} parent=0
    _
  %s8 = ssub.s32 1, %s6
  %s9 = scalar_select 0, %s8, %s6
  $region1: #{tpu_custom_call.1} parent=0
    #allocation2 [shape = 'u8[131072]{0}', space=vmem, size = 0x20000, scoped, tag = 'output window, operand 0']
    #allocation3 [shape = 's32[2]{0}', space=sflag, size = 0x8, scoped, tag = 'scoped memory for tpu_custom_call.1']
    %10 = vsyncpa [#allocation3], 0
    %s11 = scalar_lea.sflag [#allocation3], 1
    %12 = vsyncpa %s11, 0
    loop: start=0, step=1, limit=4
    $region2: #{tpu_custom_call.1} parent=1 // loop_pre_header
      _
    $region3: #{tpu_custom_call.1} parent=1 // loop_header
      %s14 = sphi 0, %s18
      %p15 = scmp.ge.s32.totalorder %s14, 4
      %s24 = sphi 0, %s26
      %s27 = sphi 0, %s24
      %s28 = sphi 0, %s27
      %s44 = sphi 0, %s28
      %s48 = sphi 0, %s48
      %s50 = sphi 0, %s48
      %s51 = sphi 0, %s50
      %s65 = sphi 0, %s51
      %s69 = sphi 0, %s69
      %s71 = sphi 0, %s69
      %s72 = sphi 0, %s71
      %s86 = sphi 0, %s72
      %s90 = sphi 0, %s90
      %s92 = sphi 0, %s90
      %s93 = sphi 0, %s92
      %s107 = sphi 0, %s93
      %s111 = sphi 0, %s111
      %s113 = sphi 0, %s111
      %s114 = sphi 0, %s113
      %s128 = sphi 0, %s114
      %s134 = sphi 0, %s136
      %s137 = sphi 0, %s134
      %s138 = sphi 0, %s137
      %s154 = sphi 0, %s138
    $region4: #{tpu_custom_call.1} parent=1 // loop_header_branch
      %17 = sbr.rel (%p15) target = $region8
    $region5: #{tpu_custom_call.1} parent=1 // loop_body
      %s19 = ssub.s32 %s14, 1
      %s20 = ssub.s32 %s14, 2
      %s21 = sadd.s32 %s14, 1
      %s22 = ssub.s32 %s14, %s21
      %p23 = scmp.eq.s32.totalorder %s22, 0
      %s25 = sadd.s32 %s24, 1
      %s26 = scalar_select %p23, %s24, %s25
      %p29 = pneg %p23
      %p30 = scmp.eq.s32.totalorder %s14, 1
      %p31 = por %p29, %p30
      %p32 = scmp.ne.s32.totalorder %s24, %s27
      %p33 = scmp.eq.s32.totalorder %s14, 0
      %p34 = por %p32, %p33
      %p35 = scmp.ne.s32.totalorder %s24, %s27
      %p36 = scmp.eq.s32.totalorder %s19, 1
      %p37 = por %p35, %p36
      %p38 = scmp.ne.s32.totalorder %s27, %s28
      %p39 = scmp.eq.s32.totalorder %s19, 0
      %p40 = por %p38, %p39
      %p41 = scmp.ne.s32.totalorder %s27, %s28
      %p42 = scmp.eq.s32.totalorder %s20, 1
      %p43 = por %p41, %p42
      %p45 = scmp.ne.s32.totalorder %s28, %s44
      %p46 = scmp.eq.s32.totalorder %s20, 0
      %p47 = por %p45, %p46
      %s49 = sadd.s32 %s48, 1
      %p52 = scmp.eq.s32.totalorder %s14, 1
      %p53 = scmp.ne.s32.totalorder %s48, %s50
      %p54 = scmp.eq.s32.totalorder %s14, 0
      %p55 = por %p53, %p54
      %p56 = scmp.ne.s32.totalorder %s48, %s50
      %p57 = scmp.eq.s32.totalorder %s19, 1
      %p58 = por %p56, %p57
      %p59 = scmp.ne.s32.totalorder %s50, %s51
      %p60 = scmp.eq.s32.totalorder %s19, 0
      %p61 = por %p59, %p60
      %p62 = scmp.ne.s32.totalorder %s50, %s51
      %p63 = scmp.eq.s32.totalorder %s20, 1
      %p64 = por %p62, %p63
      %p66 = scmp.ne.s32.totalorder %s51, %s65
      %p67 = scmp.eq.s32.totalorder %s20, 0
      %p68 = por %p66, %p67
      %s70 = sadd.s32 %s69, 1
      %p73 = scmp.eq.s32.totalorder %s14, 1
      %p74 = scmp.ne.s32.totalorder %s69, %s71
      %p75 = scmp.eq.s32.totalorder %s14, 0
      %p76 = por %p74, %p75
      %p77 = scmp.ne.s32.totalorder %s69, %s71
      %p78 = scmp.eq.s32.totalorder %s19, 1
      %p79 = por %p77, %p78
      %p80 = scmp.ne.s32.totalorder %s71, %s72
      %p81 = scmp.eq.s32.totalorder %s19, 0
      %p82 = por %p80, %p81
      %p83 = scmp.ne.s32.totalorder %s71, %s72
      %p84 = scmp.eq.s32.totalorder %s20, 1
      %p85 = por %p83, %p84
      %p87 = scmp.ne.s32.totalorder %s72, %s86
      %p88 = scmp.eq.s32.totalorder %s20, 0
      %p89 = por %p87, %p88
      %s91 = sadd.s32 %s90, 1
      %p94 = scmp.eq.s32.totalorder %s14, 1
      %p95 = scmp.ne.s32.totalorder %s90, %s92
      %p96 = scmp.eq.s32.totalorder %s14, 0
      %p97 = por %p95, %p96
      %p98 = scmp.ne.s32.totalorder %s90, %s92
      %p99 = scmp.eq.s32.totalorder %s19, 1
      %p100 = por %p98, %p99
      %p101 = scmp.ne.s32.totalorder %s92, %s93
      %p102 = scmp.eq.s32.totalorder %s19, 0
      %p103 = por %p101, %p102
      %p104 = scmp.ne.s32.totalorder %s92, %s93
      %p105 = scmp.eq.s32.totalorder %s20, 1
      %p106 = por %p104, %p105
      %p108 = scmp.ne.s32.totalorder %s93, %s107
      %p109 = scmp.eq.s32.totalorder %s20, 0
      %p110 = por %p108, %p109
      %s112 = sadd.s32 %s111, 1
      %p115 = scmp.eq.s32.totalorder %s14, 1
      %p116 = scmp.ne.s32.totalorder %s111, %s113
      %p117 = scmp.eq.s32.totalorder %s14, 0
      %p118 = por %p116, %p117
      %p119 = scmp.ne.s32.totalorder %s111, %s113
      %p120 = scmp.eq.s32.totalorder %s19, 1
      %p121 = por %p119, %p120
      %p122 = scmp.ne.s32.totalorder %s113, %s114
      %p123 = scmp.eq.s32.totalorder %s19, 0
      %p124 = por %p122, %p123
      %p125 = scmp.ne.s32.totalorder %s113, %s114
      %p126 = scmp.eq.s32.totalorder %s20, 1
      %p127 = por %p125, %p126
      %p129 = scmp.ne.s32.totalorder %s114, %s128
      %p130 = scmp.eq.s32.totalorder %s20, 0
      %p131 = por %p129, %p130
      %s132 = ssub.s32 %s14, %s21
      %p133 = scmp.eq.s32.totalorder %s132, 0
      %s135 = sadd.s32 %s134, 1
      %s136 = scalar_select %p133, %s134, %s135
      %p139 = pneg %p133
      %p140 = scmp.eq.s32.totalorder %s14, 1
      %p141 = por %p139, %p140
      %p142 = scmp.ne.s32.totalorder %s134, %s137
      %p143 = scmp.eq.s32.totalorder %s14, 0
      %p144 = por %p142, %p143
      %p145 = scmp.ne.s32.totalorder %s134, %s137
      %p146 = scmp.eq.s32.totalorder %s19, 1
      %p147 = por %p145, %p146
      %p148 = scmp.ne.s32.totalorder %s137, %s138
      %p149 = scmp.eq.s32.totalorder %s19, 0
      %p150 = por %p148, %p149
      %p151 = scmp.ne.s32.totalorder %s137, %s138
      %p152 = scmp.eq.s32.totalorder %s20, 1
      %p153 = por %p151, %p152
      %p155 = scmp.ne.s32.totalorder %s138, %s154
      %p156 = scmp.eq.s32.totalorder %s20, 0
      %p157 = por %p155, %p156
      %p158 = scmp.le.s32.totalorder 1, %s14
      %p159 = scmp.lt.s32.totalorder %s14, 3
      %p160 = pnand %p158, %p159
      %p161 = pneg %p160
      // Predicated region
      $region9: #{tpu_custom_call.1} parent=5 // pred_check
        _
      $region10: #{tpu_custom_call.1} parent=5 // pred_check_branch
        %163 = sbr.rel (%p160) target = $region12
      $region11: #{tpu_custom_call.1} parent=5 // pred_region
        %s164 = ssub.s32 %s14, 1
        // Predicated region
        $region13: #{tpu_custom_call.1} parent=11 // pred_check
          %p165 = pneg %p61
        $region14: #{tpu_custom_call.1} parent=11 // pred_check_branch
          %167 = sbr.rel (%p165) target = $region16
        $region15: #{tpu_custom_call.1} parent=11 // pred_region
          _
        $region16: #{tpu_custom_call.1} parent=11 // pred_fallthru
          _
        // Predicated region
        $region17: #{tpu_custom_call.1} parent=11 // pred_check
          %p168 = pneg %p82
        $region18: #{tpu_custom_call.1} parent=11 // pred_check_branch
          %170 = sbr.rel (%p168) target = $region20
        $region19: #{tpu_custom_call.1} parent=11 // pred_region
          _
        $region20: #{tpu_custom_call.1} parent=11 // pred_fallthru
          _
        // Predicated region
        $region21: #{tpu_custom_call.1} parent=11 // pred_check
          %p171 = pneg %p103
        $region22: #{tpu_custom_call.1} parent=11 // pred_check_branch
          %173 = sbr.rel (%p171) target = $region24
        $region23: #{tpu_custom_call.1} parent=11 // pred_region
          _
        $region24: #{tpu_custom_call.1} parent=11 // pred_fallthru
          _
        // Predicated region
        $region25: #{tpu_custom_call.1} parent=11 // pred_check
          %p174 = pneg %p124
        $region26: #{tpu_custom_call.1} parent=11 // pred_check_branch
          %176 = sbr.rel (%p174) target = $region28
        $region27: #{tpu_custom_call.1} parent=11 // pred_region
          _
        $region28: #{tpu_custom_call.1} parent=11 // pred_fallthru
          _
      $region12: #{tpu_custom_call.1} parent=5 // pred_fallthru
        _
      %p177 = scmp.lt.s32.totalorder %s14, 2
      // Predicated region
      $region29: #{tpu_custom_call.1} parent=5 // pred_check
        %p178 = pneg %p177
      $region30: #{tpu_custom_call.1} parent=5 // pred_check_branch
        %180 = sbr.rel (%p178) target = $region32
      $region31: #{tpu_custom_call.1} parent=5 // pred_region
        // Predicated region
        $region33: #{tpu_custom_call.1} parent=31 // pred_check
          %p181 = pneg %p34
        $region34: #{tpu_custom_call.1} parent=31 // pred_check_branch
          %183 = sbr.rel (%p181) target = $region36
        $region35: #{tpu_custom_call.1} parent=31 // pred_region
          %s184 = smul.u32 16, %s14
          %p185 = scmp.lt.s32.totalorder %s184, 31
          %s186 = scalar_select %p185, %s184, 31
          %s187 = smul.addr %s186, 8
          %s188 = scalar_lea.vmem %s0, %s187
          %s189 = smul.u32 16, %s14
        $region36: #{tpu_custom_call.1} parent=31 // pred_fallthru
          _
      $region32: #{tpu_custom_call.1} parent=5 // pred_fallthru
        _
      %p190 = scmp.le.s32.totalorder 1, %s14
      %p191 = scmp.lt.s32.totalorder %s14, 3
      %p192 = pnand %p190, %p191
      %p193 = pneg %p192
      // Predicated region
      $region37: #{tpu_custom_call.1} parent=5 // pred_check
        _
      $region38: #{tpu_custom_call.1} parent=5 // pred_check_branch
        %195 = sbr.rel (%p192) target = $region40
      $region39: #{tpu_custom_call.1} parent=5 // pred_region
        %s196 = ssub.s32 %s14, 1
        %s197 = smul.u32 16, %s19
        %p198 = scmp.lt.s32.totalorder %s197, 31
        %s199 = scalar_select %p198, %s197, 31
        %s200 = smul.addr %s199, 8
        %s201 = scalar_lea.vmem %s0, %s200
        %p202 = pneg %p40
        %p203 = pneg %p37
        %p204 = pneg %p61
        %p205 = pneg %p58
        %p206 = pneg %p82
        %p207 = pneg %p79
        %p208 = pneg %p103
        %p209 = pneg %p100
        %p210 = pneg %p124
        %p211 = pneg %p121
        %p212 = pneg %p150
        %p213 = pneg %p147
        %s214 = sand.u32 %s137, 1
        %s215 = scalar_lea.sflag [#allocation3], %s214
        %s216 = sand.u32 %s137, 1
        %s217 = smul.addr %s216, 128
        %s218 = scalar_lea.vmem [#allocation2], %s217
        %s219 = smul.u32 16, %s19
        %p220 = scmp.lt.s32.totalorder %s219, 31
        %s221 = scalar_select %p220, %s219, 31
        %s222 = smul.addr %s221, 8
        %s223 = scalar_lea.vmem %s0, %s222
        %s224 = smul.u32 16, %s19
        %s225 = smul.u32 16, %s19
        %v226 = vld [vmem:[%s1] sm:$0x1]
        %v228 = vlaneseq
        %v229 = vshrl.u32 %v228, 7
        %v230 = vsub.s32 0, %v229
        %v231 = vrot.slane %v226, %v230
        %v233 = vld [vmem:[%s2 + $0x10] sm:$0x1]
        %v234 = vlaneseq
        %v235 = vshrl.u32 %v234, 7
        %v236 = vsub.s32 0, %v235
        %v237 = vrot.slane %v233, %v236
        loop: start=0, step=1, limit=2
        $region41: #{tpu_custom_call.1} parent=39 // loop_pre_header
          _
        $region42: #{tpu_custom_call.1} parent=39 // loop_header
          %s239 = sphi 0, %s243
          %p240 = scmp.ge.s32.totalorder %s239, 2
        $region43: #{tpu_custom_call.1} parent=39 // loop_header_branch
          %242 = sbr.rel (%p240) target = $region47
        $region44: #{tpu_custom_call.1} parent=39 // loop_body
          %s244 = smul.u32 %s239, 64
          %s245 = scalar_lea.vmem %s223, %s244
          %v246 = vld [vmem:[%s245] sm:$0xff]
          %v247 = vld [vmem:[%s245 + $0x8] sm:$0xff]
          %v248 = vld [vmem:[%s245 + $0x10] sm:$0xff]
          %v249 = vld [vmem:[%s245 + $0x18] sm:$0xff]
          %v250 = vld [vmem:[%s245 + $0x20] sm:$0xff]
          %v251 = vld [vmem:[%s245 + $0x28] sm:$0xff]
          %v252 = vld [vmem:[%s245 + $0x30] sm:$0xff]
          %v253 = vld [vmem:[%s245 + $0x38] sm:$0xff]
          %255 = vset.pattern.permute.xlu0 0
          %256 = vperm.xlu0 %255, %v246
          %v257 = vpop.permute.xlu0 %256
          %260 = vset.pattern.permute.xlu0 0
          %261 = vperm.xlu0 %260, %v247
          %v262 = vpop.permute.xlu0 %261
          %265 = vset.pattern.permute.xlu0 0
          %266 = vperm.xlu0 %265, %v248
          %v267 = vpop.permute.xlu0 %266
          %270 = vset.pattern.permute.xlu0 0
          %271 = vperm.xlu0 %270, %v249
          %v272 = vpop.permute.xlu0 %271
          %275 = vset.pattern.permute.xlu0 0
          %276 = vperm.xlu0 %275, %v250
          %v277 = vpop.permute.xlu0 %276
          %280 = vset.pattern.permute.xlu0 0
          %281 = vperm.xlu0 %280, %v251
          %v282 = vpop.permute.xlu0 %281
          %285 = vset.pattern.permute.xlu0 0
          %286 = vperm.xlu0 %285, %v252
          %v287 = vpop.permute.xlu0 %286
          %290 = vset.pattern.permute.xlu0 0
          %291 = vperm.xlu0 %290, %v253
          %v292 = vpop.permute.xlu0 %291
          %v294 = vmul.f32 %v257, %v231
          %v295 = vmul.f32 %v262, %v231
          %v296 = vmul.f32 %v267, %v231
          %v297 = vmul.f32 %v272, %v231
          %v298 = vmul.f32 %v277, %v231
          %v299 = vmul.f32 %v282, %v231
          %v300 = vmul.f32 %v287, %v231
          %v301 = vmul.f32 %v292, %v231
          %v302 = vld [vmem:[%s2] sm:$0x1]
          %v303 = vlaneseq
          %v304 = vshrl.u32 %v303, 7
          %v305 = vsub.s32 0, %v304
          %v306 = vrot.slane %v302, %v305
          %v307 = vadd.f32 %v294, %v306
          %v308 = vadd.f32 %v295, %v306
          %v309 = vadd.f32 %v296, %v306
          %v310 = vadd.f32 %v297, %v306
          %v311 = vadd.f32 %v298, %v306
          %v312 = vadd.f32 %v299, %v306
          %v313 = vadd.f32 %v300, %v306
          %v314 = vadd.f32 %v301, %v306
          %v315 = vmax.f32 %v237, %v307
          %v316 = vmax.f32 %v237, %v308
          %v317 = vmax.f32 %v237, %v309
          %v318 = vmax.f32 %v237, %v310
          %v319 = vmax.f32 %v237, %v311
          %v320 = vmax.f32 %v237, %v312
          %v321 = vmax.f32 %v237, %v313
          %v322 = vmax.f32 %v237, %v314
          %323 = vset.pattern.permute.xlu0 1
          %324 = vperm.xlu0 %323, %v246
          %v325 = vpop.permute.xlu0 %324
          %327 = vset.pattern.permute.xlu0 1
          %328 = vperm.xlu0 %327, %v247
          %v329 = vpop.permute.xlu0 %328
          %331 = vset.pattern.permute.xlu0 1
          %332 = vperm.xlu0 %331, %v248
          %v333 = vpop.permute.xlu0 %332
          %335 = vset.pattern.permute.xlu0 1
          %336 = vperm.xlu0 %335, %v249
          %v337 = vpop.permute.xlu0 %336
          %339 = vset.pattern.permute.xlu0 1
          %340 = vperm.xlu0 %339, %v250
          %v341 = vpop.permute.xlu0 %340
          %343 = vset.pattern.permute.xlu0 1
          %344 = vperm.xlu0 %343, %v251
          %v345 = vpop.permute.xlu0 %344
          %347 = vset.pattern.permute.xlu0 1
          %348 = vperm.xlu0 %347, %v252
          %v349 = vpop.permute.xlu0 %348
          %351 = vset.pattern.permute.xlu0 1
          %352 = vperm.xlu0 %351, %v253
          %v353 = vpop.permute.xlu0 %352
          %v355 = vmul.f32 %v325, %v231
          %v356 = vmul.f32 %v329, %v231
          %v357 = vmul.f32 %v333, %v231
          %v358 = vmul.f32 %v337, %v231
          %v359 = vmul.f32 %v341, %v231
          %v360 = vmul.f32 %v345, %v231
          %v361 = vmul.f32 %v349, %v231
          %v362 = vmul.f32 %v353, %v231
          %v363 = vld [vmem:[%s2 + $0x1] sm:$0x1]
          %v364 = vlaneseq
          %v365 = vshrl.u32 %v364, 7
          %v366 = vsub.s32 0, %v365
          %v367 = vrot.slane %v363, %v366
          %v368 = vadd.f32 %v355, %v367
          %v369 = vadd.f32 %v356, %v367
          %v370 = vadd.f32 %v357, %v367
          %v371 = vadd.f32 %v358, %v367
          %v372 = vadd.f32 %v359, %v367
          %v373 = vadd.f32 %v360, %v367
          %v374 = vadd.f32 %v361, %v367
          %v375 = vadd.f32 %v362, %v367
          %v376 = vmax.f32 %v315, %v368
          %v377 = vmax.f32 %v316, %v369
          %v378 = vmax.f32 %v317, %v370
          %v379 = vmax.f32 %v318, %v371
          %v380 = vmax.f32 %v319, %v372
          %v381 = vmax.f32 %v320, %v373
          %v382 = vmax.f32 %v321, %v374
          %v383 = vmax.f32 %v322, %v375
          %384 = vset.pattern.permute.xlu0 2
          %385 = vperm.xlu0 %384, %v246
          %v386 = vpop.permute.xlu0 %385
          %388 = vset.pattern.permute.xlu0 2
          %389 = vperm.xlu0 %388, %v247
          %v390 = vpop.permute.xlu0 %389
          %392 = vset.pattern.permute.xlu0 2
          %393 = vperm.xlu0 %392, %v248
          %v394 = vpop.permute.xlu0 %393
          %396 = vset.pattern.permute.xlu0 2
          %397 = vperm.xlu0 %396, %v249
          %v398 = vpop.permute.xlu0 %397
          %400 = vset.pattern.permute.xlu0 2
          %401 = vperm.xlu0 %400, %v250
          %v402 = vpop.permute.xlu0 %401
          %404 = vset.pattern.permute.xlu0 2
          %405 = vperm.xlu0 %404, %v251
          %v406 = vpop.permute.xlu0 %405
          %408 = vset.pattern.permute.xlu0 2
          %409 = vperm.xlu0 %408, %v252
          %v410 = vpop.permute.xlu0 %409
          %412 = vset.pattern.permute.xlu0 2
          %413 = vperm.xlu0 %412, %v253
          %v414 = vpop.permute.xlu0 %413
          %v416 = vmul.f32 %v386, %v231
          %v417 = vmul.f32 %v390, %v231
          %v418 = vmul.f32 %v394, %v231
          %v419 = vmul.f32 %v398, %v231
          %v420 = vmul.f32 %v402, %v231
          %v421 = vmul.f32 %v406, %v231
          %v422 = vmul.f32 %v410, %v231
          %v423 = vmul.f32 %v414, %v231
          %v424 = vld [vmem:[%s2 + $0x2] sm:$0x1]
          %v425 = vlaneseq
          %v426 = vshrl.u32 %v425, 7
          %v427 = vsub.s32 0, %v426
          %v428 = vrot.slane %v424, %v427
          %v429 = vadd.f32 %v416, %v428
          %v430 = vadd.f32 %v417, %v428
          %v431 = vadd.f32 %v418, %v428
          %v432 = vadd.f32 %v419, %v428
          %v433 = vadd.f32 %v420, %v428
          %v434 = vadd.f32 %v421, %v428
          %v435 = vadd.f32 %v422, %v428
          %v436 = vadd.f32 %v423, %v428
          %v437 = vmax.f32 %v376, %v429
          %v438 = vmax.f32 %v377, %v430
          %v439 = vmax.f32 %v378, %v431
          %v440 = vmax.f32 %v379, %v432
          %v441 = vmax.f32 %v380, %v433
          %v442 = vmax.f32 %v381, %v434
          %v443 = vmax.f32 %v382, %v435
          %v444 = vmax.f32 %v383, %v436
          %445 = vset.pattern.permute.xlu0 3
          %446 = vperm.xlu0 %445, %v246
          %v447 = vpop.permute.xlu0 %446
          %449 = vset.pattern.permute.xlu0 3
          %450 = vperm.xlu0 %449, %v247
          %v451 = vpop.permute.xlu0 %450
          %453 = vset.pattern.permute.xlu0 3
          %454 = vperm.xlu0 %453, %v248
          %v455 = vpop.permute.xlu0 %454
          %457 = vset.pattern.permute.xlu0 3
          %458 = vperm.xlu0 %457, %v249
          %v459 = vpop.permute.xlu0 %458
          %461 = vset.pattern.permute.xlu0 3
          %462 = vperm.xlu0 %461, %v250
          %v463 = vpop.permute.xlu0 %462
          %465 = vset.pattern.permute.xlu0 3
          %466 = vperm.xlu0 %465, %v251
          %v467 = vpop.permute.xlu0 %466
          %469 = vset.pattern.permute.xlu0 3
          %470 = vperm.xlu0 %469, %v252
          %v471 = vpop.permute.xlu0 %470
          %473 = vset.pattern.permute.xlu0 3
          %474 = vperm.xlu0 %473, %v253
          %v475 = vpop.permute.xlu0 %474
          %v477 = vmul.f32 %v447, %v231
          %v478 = vmul.f32 %v451, %v231
          %v479 = vmul.f32 %v455, %v231
          %v480 = vmul.f32 %v459, %v231
          %v481 = vmul.f32 %v463, %v231
          %v482 = vmul.f32 %v467, %v231
          %v483 = vmul.f32 %v471, %v231
          %v484 = vmul.f32 %v475, %v231
          %v485 = vld [vmem:[%s2 + $0x3] sm:$0x1]
          %v486 = vlaneseq
          %v487 = vshrl.u32 %v486, 7
          %v488 = vsub.s32 0, %v487
          %v489 = vrot.slane %v485, %v488
          %v490 = vadd.f32 %v477, %v489
          %v491 = vadd.f32 %v478, %v489
          %v492 = vadd.f32 %v479, %v489
          %v493 = vadd.f32 %v480, %v489
          %v494 = vadd.f32 %v481, %v489
          %v495 = vadd.f32 %v482, %v489
          %v496 = vadd.f32 %v483, %v489
          %v497 = vadd.f32 %v484, %v489
          %v498 = vmax.f32 %v437, %v490
          %v499 = vmax.f32 %v438, %v491
          %v500 = vmax.f32 %v439, %v492
          %v501 = vmax.f32 %v440, %v493
          %v502 = vmax.f32 %v441, %v494
          %v503 = vmax.f32 %v442, %v495
          %v504 = vmax.f32 %v443, %v496
          %v505 = vmax.f32 %v444, %v497
          %506 = vset.pattern.permute.xlu0 4
          %507 = vperm.xlu0 %506, %v246
          %v508 = vpop.permute.xlu0 %507
          %510 = vset.pattern.permute.xlu0 4
          %511 = vperm.xlu0 %510, %v247
          %v512 = vpop.permute.xlu0 %511
          %514 = vset.pattern.permute.xlu0 4
          %515 = vperm.xlu0 %514, %v248
          %v516 = vpop.permute.xlu0 %515
          %518 = vset.pattern.permute.xlu0 4
          %519 = vperm.xlu0 %518, %v249
          %v520 = vpop.permute.xlu0 %519
          %522 = vset.pattern.permute.xlu0 4
          %523 = vperm.xlu0 %522, %v250
          %v524 = vpop.permute.xlu0 %523
          %526 = vset.pattern.permute.xlu0 4
          %527 = vperm.xlu0 %526, %v251
          %v528 = vpop.permute.xlu0 %527
          %530 = vset.pattern.permute.xlu0 4
          %531 = vperm.xlu0 %530, %v252
          %v532 = vpop.permute.xlu0 %531
          %534 = vset.pattern.permute.xlu0 4
          %535 = vperm.xlu0 %534, %v253
          %v536 = vpop.permute.xlu0 %535
          %v538 = vmul.f32 %v508, %v231
          %v539 = vmul.f32 %v512, %v231
          %v540 = vmul.f32 %v516, %v231
          %v541 = vmul.f32 %v520, %v231
          %v542 = vmul.f32 %v524, %v231
          %v543 = vmul.f32 %v528, %v231
          %v544 = vmul.f32 %v532, %v231
          %v545 = vmul.f32 %v536, %v231
          %v546 = vld [vmem:[%s2 + $0x4] sm:$0x1]
          %v547 = vlaneseq
          %v548 = vshrl.u32 %v547, 7
          %v549 = vsub.s32 0, %v548
          %v550 = vrot.slane %v546, %v549
          %v551 = vadd.f32 %v538, %v550
          %v552 = vadd.f32 %v539, %v550
          %v553 = vadd.f32 %v540, %v550
          %v554 = vadd.f32 %v541, %v550
          %v555 = vadd.f32 %v542, %v550
          %v556 = vadd.f32 %v543, %v550
          %v557 = vadd.f32 %v544, %v550
          %v558 = vadd.f32 %v545, %v550
          %v559 = vmax.f32 %v498, %v551
          %v560 = vmax.f32 %v499, %v552
          %v561 = vmax.f32 %v500, %v553
          %v562 = vmax.f32 %v501, %v554
          %v563 = vmax.f32 %v502, %v555
          %v564 = vmax.f32 %v503, %v556
          %v565 = vmax.f32 %v504, %v557
          %v566 = vmax.f32 %v505, %v558
          %567 = vset.pattern.permute.xlu0 5
          %568 = vperm.xlu0 %567, %v246
          %v569 = vpop.permute.xlu0 %568
          %571 = vset.pattern.permute.xlu0 5
          %572 = vperm.xlu0 %571, %v247
          %v573 = vpop.permute.xlu0 %572
          %575 = vset.pattern.permute.xlu0 5
          %576 = vperm.xlu0 %575, %v248
          %v577 = vpop.permute.xlu0 %576
          %579 = vset.pattern.permute.xlu0 5
          %580 = vperm.xlu0 %579, %v249
          %v581 = vpop.permute.xlu0 %580
          %583 = vset.pattern.permute.xlu0 5
          %584 = vperm.xlu0 %583, %v250
          %v585 = vpop.permute.xlu0 %584
          %587 = vset.pattern.permute.xlu0 5
          %588 = vperm.xlu0 %587, %v251
          %v589 = vpop.permute.xlu0 %588
          %591 = vset.pattern.permute.xlu0 5
          %592 = vperm.xlu0 %591, %v252
          %v593 = vpop.permute.xlu0 %592
          %595 = vset.pattern.permute.xlu0 5
          %596 = vperm.xlu0 %595, %v253
          %v597 = vpop.permute.xlu0 %596
          %v599 = vmul.f32 %v569, %v231
          %v600 = vmul.f32 %v573, %v231
          %v601 = vmul.f32 %v577, %v231
          %v602 = vmul.f32 %v581, %v231
          %v603 = vmul.f32 %v585, %v231
          %v604 = vmul.f32 %v589, %v231
          %v605 = vmul.f32 %v593, %v231
          %v606 = vmul.f32 %v597, %v231
          %v607 = vld [vmem:[%s2 + $0x5] sm:$0x1]
          %v608 = vlaneseq
          %v609 = vshrl.u32 %v608, 7
          %v610 = vsub.s32 0, %v609
          %v611 = vrot.slane %v607, %v610
          %v612 = vadd.f32 %v599, %v611
          %v613 = vadd.f32 %v600, %v611
          %v614 = vadd.f32 %v601, %v611
          %v615 = vadd.f32 %v602, %v611
          %v616 = vadd.f32 %v603, %v611
          %v617 = vadd.f32 %v604, %v611
          %v618 = vadd.f32 %v605, %v611
          %v619 = vadd.f32 %v606, %v611
          %v620 = vmax.f32 %v559, %v612
          %v621 = vmax.f32 %v560, %v613
          %v622 = vmax.f32 %v561, %v614
          %v623 = vmax.f32 %v562, %v615
          %v624 = vmax.f32 %v563, %v616
          %v625 = vmax.f32 %v564, %v617
          %v626 = vmax.f32 %v565, %v618
          %v627 = vmax.f32 %v566, %v619
          %628 = vset.pattern.permute.xlu0 6
          %629 = vperm.xlu0 %628, %v246
          %v630 = vpop.permute.xlu0 %629
          %632 = vset.pattern.permute.xlu0 6
          %633 = vperm.xlu0 %632, %v247
          %v634 = vpop.permute.xlu0 %633
          %636 = vset.pattern.permute.xlu0 6
          %637 = vperm.xlu0 %636, %v248
          %v638 = vpop.permute.xlu0 %637
          %640 = vset.pattern.permute.xlu0 6
          %641 = vperm.xlu0 %640, %v249
          %v642 = vpop.permute.xlu0 %641
          %644 = vset.pattern.permute.xlu0 6
          %645 = vperm.xlu0 %644, %v250
          %v646 = vpop.permute.xlu0 %645
          %648 = vset.pattern.permute.xlu0 6
          %649 = vperm.xlu0 %648, %v251
          %v650 = vpop.permute.xlu0 %649
          %652 = vset.pattern.permute.xlu0 6
          %653 = vperm.xlu0 %652, %v252
          %v654 = vpop.permute.xlu0 %653
          %656 = vset.pattern.permute.xlu0 6
          %657 = vperm.xlu0 %656, %v253
          %v658 = vpop.permute.xlu0 %657
          %v660 = vmul.f32 %v630, %v231
          %v661 = vmul.f32 %v634, %v231
          %v662 = vmul.f32 %v638, %v231
          %v663 = vmul.f32 %v642, %v231
          %v664 = vmul.f32 %v646, %v231
          %v665 = vmul.f32 %v650, %v231
          %v666 = vmul.f32 %v654, %v231
          %v667 = vmul.f32 %v658, %v231
          %v668 = vld [vmem:[%s2 + $0x6] sm:$0x1]
          %v669 = vlaneseq
          %v670 = vshrl.u32 %v669, 7
          %v671 = vsub.s32 0, %v670
          %v672 = vrot.slane %v668, %v671
          %v673 = vadd.f32 %v660, %v672
          %v674 = vadd.f32 %v661, %v672
          %v675 = vadd.f32 %v662, %v672
          %v676 = vadd.f32 %v663, %v672
          %v677 = vadd.f32 %v664, %v672
          %v678 = vadd.f32 %v665, %v672
          %v679 = vadd.f32 %v666, %v672
          %v680 = vadd.f32 %v667, %v672
          %v681 = vmax.f32 %v620, %v673
          %v682 = vmax.f32 %v621, %v674
          %v683 = vmax.f32 %v622, %v675
          %v684 = vmax.f32 %v623, %v676
          %v685 = vmax.f32 %v624, %v677
          %v686 = vmax.f32 %v625, %v678
          %v687 = vmax.f32 %v626, %v679
          %v688 = vmax.f32 %v627, %v680
          %689 = vset.pattern.permute.xlu0 7
          %690 = vperm.xlu0 %689, %v246
          %v691 = vpop.permute.xlu0 %690
          %693 = vset.pattern.permute.xlu0 7
          %694 = vperm.xlu0 %693, %v247
          %v695 = vpop.permute.xlu0 %694
          %697 = vset.pattern.permute.xlu0 7
          %698 = vperm.xlu0 %697, %v248
          %v699 = vpop.permute.xlu0 %698
          %701 = vset.pattern.permute.xlu0 7
          %702 = vperm.xlu0 %701, %v249
          %v703 = vpop.permute.xlu0 %702
          %705 = vset.pattern.permute.xlu0 7
          %706 = vperm.xlu0 %705, %v250
          %v707 = vpop.permute.xlu0 %706
          %709 = vset.pattern.permute.xlu0 7
          %710 = vperm.xlu0 %709, %v251
          %v711 = vpop.permute.xlu0 %710
          %713 = vset.pattern.permute.xlu0 7
          %714 = vperm.xlu0 %713, %v252
          %v715 = vpop.permute.xlu0 %714
          %717 = vset.pattern.permute.xlu0 7
          %718 = vperm.xlu0 %717, %v253
          %v719 = vpop.permute.xlu0 %718
          %v721 = vmul.f32 %v691, %v231
          %v722 = vmul.f32 %v695, %v231
          %v723 = vmul.f32 %v699, %v231
          %v724 = vmul.f32 %v703, %v231
          %v725 = vmul.f32 %v707, %v231
          %v726 = vmul.f32 %v711, %v231
          %v727 = vmul.f32 %v715, %v231
          %v728 = vmul.f32 %v719, %v231
          %v729 = vld [vmem:[%s2 + $0x7] sm:$0x1]
          %v730 = vlaneseq
          %v731 = vshrl.u32 %v730, 7
          %v732 = vsub.s32 0, %v731
          %v733 = vrot.slane %v729, %v732
          %v734 = vadd.f32 %v721, %v733
          %v735 = vadd.f32 %v722, %v733
          %v736 = vadd.f32 %v723, %v733
          %v737 = vadd.f32 %v724, %v733
          %v738 = vadd.f32 %v725, %v733
          %v739 = vadd.f32 %v726, %v733
          %v740 = vadd.f32 %v727, %v733
          %v741 = vadd.f32 %v728, %v733
          %v742 = vmax.f32 %v681, %v734
          %v743 = vmax.f32 %v682, %v735
          %v744 = vmax.f32 %v683, %v736
          %v745 = vmax.f32 %v684, %v737
          %v746 = vmax.f32 %v685, %v738
          %v747 = vmax.f32 %v686, %v739
          %v748 = vmax.f32 %v687, %v740
          %v749 = vmax.f32 %v688, %v741
          %750 = vset.pattern.permute.xlu0 8
          %751 = vperm.xlu0 %750, %v246
          %v752 = vpop.permute.xlu0 %751
          %754 = vset.pattern.permute.xlu0 8
          %755 = vperm.xlu0 %754, %v247
          %v756 = vpop.permute.xlu0 %755
          %758 = vset.pattern.permute.xlu0 8
          %759 = vperm.xlu0 %758, %v248
          %v760 = vpop.permute.xlu0 %759
          %762 = vset.pattern.permute.xlu0 8
          %763 = vperm.xlu0 %762, %v249
          %v764 = vpop.permute.xlu0 %763
          %766 = vset.pattern.permute.xlu0 8
          %767 = vperm.xlu0 %766, %v250
          %v768 = vpop.permute.xlu0 %767
          %770 = vset.pattern.permute.xlu0 8
          %771 = vperm.xlu0 %770, %v251
          %v772 = vpop.permute.xlu0 %771
          %774 = vset.pattern.permute.xlu0 8
          %775 = vperm.xlu0 %774, %v252
          %v776 = vpop.permute.xlu0 %775
          %778 = vset.pattern.permute.xlu0 8
          %779 = vperm.xlu0 %778, %v253
          %v780 = vpop.permute.xlu0 %779
          %v782 = vmul.f32 %v752, %v231
          %v783 = vmul.f32 %v756, %v231
          %v784 = vmul.f32 %v760, %v231
          %v785 = vmul.f32 %v764, %v231
          %v786 = vmul.f32 %v768, %v231
          %v787 = vmul.f32 %v772, %v231
          %v788 = vmul.f32 %v776, %v231
          %v789 = vmul.f32 %v780, %v231
          %v790 = vld [vmem:[%s2 + $0x8] sm:$0x1]
          %v791 = vlaneseq
          %v792 = vshrl.u32 %v791, 7
          %v793 = vsub.s32 0, %v792
          %v794 = vrot.slane %v790, %v793
          %v795 = vadd.f32 %v782, %v794
          %v796 = vadd.f32 %v783, %v794
          %v797 = vadd.f32 %v784, %v794
          %v798 = vadd.f32 %v785, %v794
          %v799 = vadd.f32 %v786, %v794
          %v800 = vadd.f32 %v787, %v794
          %v801 = vadd.f32 %v788, %v794
          %v802 = vadd.f32 %v789, %v794
          %v803 = vmax.f32 %v742, %v795
          %v804 = vmax.f32 %v743, %v796
          %v805 = vmax.f32 %v744, %v797
          %v806 = vmax.f32 %v745, %v798
          %v807 = vmax.f32 %v746, %v799
          %v808 = vmax.f32 %v747, %v800
          %v809 = vmax.f32 %v748, %v801
          %v810 = vmax.f32 %v749, %v802
          %811 = vset.pattern.permute.xlu0 9
          %812 = vperm.xlu0 %811, %v246
          %v813 = vpop.permute.xlu0 %812
          %815 = vset.pattern.permute.xlu0 9
          %816 = vperm.xlu0 %815, %v247
          %v817 = vpop.permute.xlu0 %816
          %819 = vset.pattern.permute.xlu0 9
          %820 = vperm.xlu0 %819, %v248
          %v821 = vpop.permute.xlu0 %820
          %823 = vset.pattern.permute.xlu0 9
          %824 = vperm.xlu0 %823, %v249
          %v825 = vpop.permute.xlu0 %824
          %827 = vset.pattern.permute.xlu0 9
          %828 = vperm.xlu0 %827, %v250
          %v829 = vpop.permute.xlu0 %828
          %831 = vset.pattern.permute.xlu0 9
          %832 = vperm.xlu0 %831, %v251
          %v833 = vpop.permute.xlu0 %832
          %835 = vset.pattern.permute.xlu0 9
          %836 = vperm.xlu0 %835, %v252
          %v837 = vpop.permute.xlu0 %836
          %839 = vset.pattern.permute.xlu0 9
          %840 = vperm.xlu0 %839, %v253
          %v841 = vpop.permute.xlu0 %840
          %v843 = vmul.f32 %v813, %v231
          %v844 = vmul.f32 %v817, %v231
          %v845 = vmul.f32 %v821, %v231
          %v846 = vmul.f32 %v825, %v231
          %v847 = vmul.f32 %v829, %v231
          %v848 = vmul.f32 %v833, %v231
          %v849 = vmul.f32 %v837, %v231
          %v850 = vmul.f32 %v841, %v231
          %v851 = vld [vmem:[%s2 + $0x9] sm:$0x1]
          %v852 = vlaneseq
          %v853 = vshrl.u32 %v852, 7
          %v854 = vsub.s32 0, %v853
          %v855 = vrot.slane %v851, %v854
          %v856 = vadd.f32 %v843, %v855
          %v857 = vadd.f32 %v844, %v855
          %v858 = vadd.f32 %v845, %v855
          %v859 = vadd.f32 %v846, %v855
          %v860 = vadd.f32 %v847, %v855
          %v861 = vadd.f32 %v848, %v855
          %v862 = vadd.f32 %v849, %v855
          %v863 = vadd.f32 %v850, %v855
          %v864 = vmax.f32 %v803, %v856
          %v865 = vmax.f32 %v804, %v857
          %v866 = vmax.f32 %v805, %v858
          %v867 = vmax.f32 %v806, %v859
          %v868 = vmax.f32 %v807, %v860
          %v869 = vmax.f32 %v808, %v861
          %v870 = vmax.f32 %v809, %v862
          %v871 = vmax.f32 %v810, %v863
          %872 = vset.pattern.permute.xlu0 10
          %873 = vperm.xlu0 %872, %v246
          %v874 = vpop.permute.xlu0 %873
          %876 = vset.pattern.permute.xlu0 10
          %877 = vperm.xlu0 %876, %v247
          %v878 = vpop.permute.xlu0 %877
          %880 = vset.pattern.permute.xlu0 10
          %881 = vperm.xlu0 %880, %v248
          %v882 = vpop.permute.xlu0 %881
          %884 = vset.pattern.permute.xlu0 10
          %885 = vperm.xlu0 %884, %v249
          %v886 = vpop.permute.xlu0 %885
          %888 = vset.pattern.permute.xlu0 10
          %889 = vperm.xlu0 %888, %v250
          %v890 = vpop.permute.xlu0 %889
          %892 = vset.pattern.permute.xlu0 10
          %893 = vperm.xlu0 %892, %v251
          %v894 = vpop.permute.xlu0 %893
          %896 = vset.pattern.permute.xlu0 10
          %897 = vperm.xlu0 %896, %v252
          %v898 = vpop.permute.xlu0 %897
          %900 = vset.pattern.permute.xlu0 10
          %901 = vperm.xlu0 %900, %v253
          %v902 = vpop.permute.xlu0 %901
          %v904 = vmul.f32 %v874, %v231
          %v905 = vmul.f32 %v878, %v231
          %v906 = vmul.f32 %v882, %v231
          %v907 = vmul.f32 %v886, %v231
          %v908 = vmul.f32 %v890, %v231
          %v909 = vmul.f32 %v894, %v231
          %v910 = vmul.f32 %v898, %v231
          %v911 = vmul.f32 %v902, %v231
          %v912 = vld [vmem:[%s2 + $0xa] sm:$0x1]
          %v913 = vlaneseq
          %v914 = vshrl.u32 %v913, 7
          %v915 = vsub.s32 0, %v914
          %v916 = vrot.slane %v912, %v915
          %v917 = vadd.f32 %v904, %v916
          %v918 = vadd.f32 %v905, %v916
          %v919 = vadd.f32 %v906, %v916
          %v920 = vadd.f32 %v907, %v916
          %v921 = vadd.f32 %v908, %v916
          %v922 = vadd.f32 %v909, %v916
          %v923 = vadd.f32 %v910, %v916
          %v924 = vadd.f32 %v911, %v916
          %v925 = vmax.f32 %v864, %v917
          %v926 = vmax.f32 %v865, %v918
          %v927 = vmax.f32 %v866, %v919
          %v928 = vmax.f32 %v867, %v920
          %v929 = vmax.f32 %v868, %v921
          %v930 = vmax.f32 %v869, %v922
          %v931 = vmax.f32 %v870, %v923
          %v932 = vmax.f32 %v871, %v924
          %933 = vset.pattern.permute.xlu0 11
          %934 = vperm.xlu0 %933, %v246
          %v935 = vpop.permute.xlu0 %934
          %937 = vset.pattern.permute.xlu0 11
          %938 = vperm.xlu0 %937, %v247
          %v939 = vpop.permute.xlu0 %938
          %941 = vset.pattern.permute.xlu0 11
          %942 = vperm.xlu0 %941, %v248
          %v943 = vpop.permute.xlu0 %942
          %945 = vset.pattern.permute.xlu0 11
          %946 = vperm.xlu0 %945, %v249
          %v947 = vpop.permute.xlu0 %946
          %949 = vset.pattern.permute.xlu0 11
          %950 = vperm.xlu0 %949, %v250
          %v951 = vpop.permute.xlu0 %950
          %953 = vset.pattern.permute.xlu0 11
          %954 = vperm.xlu0 %953, %v251
          %v955 = vpop.permute.xlu0 %954
          %957 = vset.pattern.permute.xlu0 11
          %958 = vperm.xlu0 %957, %v252
          %v959 = vpop.permute.xlu0 %958
          %961 = vset.pattern.permute.xlu0 11
          %962 = vperm.xlu0 %961, %v253
          %v963 = vpop.permute.xlu0 %962
          %v965 = vmul.f32 %v935, %v231
          %v966 = vmul.f32 %v939, %v231
          %v967 = vmul.f32 %v943, %v231
          %v968 = vmul.f32 %v947, %v231
          %v969 = vmul.f32 %v951, %v231
          %v970 = vmul.f32 %v955, %v231
          %v971 = vmul.f32 %v959, %v231
          %v972 = vmul.f32 %v963, %v231
          %v973 = vld [vmem:[%s2 + $0xb] sm:$0x1]
          %v974 = vlaneseq
          %v975 = vshrl.u32 %v974, 7
          %v976 = vsub.s32 0, %v975
          %v977 = vrot.slane %v973, %v976
          %v978 = vadd.f32 %v965, %v977
          %v979 = vadd.f32 %v966, %v977
          %v980 = vadd.f32 %v967, %v977
          %v981 = vadd.f32 %v968, %v977
          %v982 = vadd.f32 %v969, %v977
          %v983 = vadd.f32 %v970, %v977
          %v984 = vadd.f32 %v971, %v977
          %v985 = vadd.f32 %v972, %v977
          %v986 = vmax.f32 %v925, %v978
          %v987 = vmax.f32 %v926, %v979
          %v988 = vmax.f32 %v927, %v980
          %v989 = vmax.f32 %v928, %v981
          %v990 = vmax.f32 %v929, %v982
          %v991 = vmax.f32 %v930, %v983
          %v992 = vmax.f32 %v931, %v984
          %v993 = vmax.f32 %v932, %v985
          %994 = vset.pattern.permute.xlu0 12
          %995 = vperm.xlu0 %994, %v246
          %v996 = vpop.permute.xlu0 %995
          %998 = vset.pattern.permute.xlu0 12
          %999 = vperm.xlu0 %998, %v247
          %v1000 = vpop.permute.xlu0 %999
          %1002 = vset.pattern.permute.xlu0 12
          %1003 = vperm.xlu0 %1002, %v248
          %v1004 = vpop.permute.xlu0 %1003
          %1006 = vset.pattern.permute.xlu0 12
          %1007 = vperm.xlu0 %1006, %v249
          %v1008 = vpop.permute.xlu0 %1007
          %1010 = vset.pattern.permute.xlu0 12
          %1011 = vperm.xlu0 %1010, %v250
          %v1012 = vpop.permute.xlu0 %1011
          %1014 = vset.pattern.permute.xlu0 12
          %1015 = vperm.xlu0 %1014, %v251
          %v1016 = vpop.permute.xlu0 %1015
          %1018 = vset.pattern.permute.xlu0 12
          %1019 = vperm.xlu0 %1018, %v252
          %v1020 = vpop.permute.xlu0 %1019
          %1022 = vset.pattern.permute.xlu0 12
          %1023 = vperm.xlu0 %1022, %v253
          %v1024 = vpop.permute.xlu0 %1023
          %v1026 = vmul.f32 %v996, %v231
          %v1027 = vmul.f32 %v1000, %v231
          %v1028 = vmul.f32 %v1004, %v231
          %v1029 = vmul.f32 %v1008, %v231
          %v1030 = vmul.f32 %v1012, %v231
          %v1031 = vmul.f32 %v1016, %v231
          %v1032 = vmul.f32 %v1020, %v231
          %v1033 = vmul.f32 %v1024, %v231
          %v1034 = vld [vmem:[%s2 + $0xc] sm:$0x1]
          %v1035 = vlaneseq
          %v1036 = vshrl.u32 %v1035, 7
          %v1037 = vsub.s32 0, %v1036
          %v1038 = vrot.slane %v1034, %v1037
          %v1039 = vadd.f32 %v1026, %v1038
          %v1040 = vadd.f32 %v1027, %v1038
          %v1041 = vadd.f32 %v1028, %v1038
          %v1042 = vadd.f32 %v1029, %v1038
          %v1043 = vadd.f32 %v1030, %v1038
          %v1044 = vadd.f32 %v1031, %v1038
          %v1045 = vadd.f32 %v1032, %v1038
          %v1046 = vadd.f32 %v1033, %v1038
          %v1047 = vmax.f32 %v986, %v1039
          %v1048 = vmax.f32 %v987, %v1040
          %v1049 = vmax.f32 %v988, %v1041
          %v1050 = vmax.f32 %v989, %v1042
          %v1051 = vmax.f32 %v990, %v1043
          %v1052 = vmax.f32 %v991, %v1044
          %v1053 = vmax.f32 %v992, %v1045
          %v1054 = vmax.f32 %v993, %v1046
          %1055 = vset.pattern.permute.xlu0 13
          %1056 = vperm.xlu0 %1055, %v246
          %v1057 = vpop.permute.xlu0 %1056
          %1059 = vset.pattern.permute.xlu0 13
          %1060 = vperm.xlu0 %1059, %v247
          %v1061 = vpop.permute.xlu0 %1060
          %1063 = vset.pattern.permute.xlu0 13
          %1064 = vperm.xlu0 %1063, %v248
          %v1065 = vpop.permute.xlu0 %1064
          %1067 = vset.pattern.permute.xlu0 13
          %1068 = vperm.xlu0 %1067, %v249
          %v1069 = vpop.permute.xlu0 %1068
          %1071 = vset.pattern.permute.xlu0 13
          %1072 = vperm.xlu0 %1071, %v250
          %v1073 = vpop.permute.xlu0 %1072
          %1075 = vset.pattern.permute.xlu0 13
          %1076 = vperm.xlu0 %1075, %v251
          %v1077 = vpop.permute.xlu0 %1076
          %1079 = vset.pattern.permute.xlu0 13
          %1080 = vperm.xlu0 %1079, %v252
          %v1081 = vpop.permute.xlu0 %1080
          %1083 = vset.pattern.permute.xlu0 13
          %1084 = vperm.xlu0 %1083, %v253
          %v1085 = vpop.permute.xlu0 %1084
          %v1087 = vmul.f32 %v1057, %v231
          %v1088 = vmul.f32 %v1061, %v231
          %v1089 = vmul.f32 %v1065, %v231
          %v1090 = vmul.f32 %v1069, %v231
          %v1091 = vmul.f32 %v1073, %v231
          %v1092 = vmul.f32 %v1077, %v231
          %v1093 = vmul.f32 %v1081, %v231
          %v1094 = vmul.f32 %v1085, %v231
          %v1095 = vld [vmem:[%s2 + $0xd] sm:$0x1]
          %v1096 = vlaneseq
          %v1097 = vshrl.u32 %v1096, 7
          %v1098 = vsub.s32 0, %v1097
          %v1099 = vrot.slane %v1095, %v1098
          %v1100 = vadd.f32 %v1087, %v1099
          %v1101 = vadd.f32 %v1088, %v1099
          %v1102 = vadd.f32 %v1089, %v1099
          %v1103 = vadd.f32 %v1090, %v1099
          %v1104 = vadd.f32 %v1091, %v1099
          %v1105 = vadd.f32 %v1092, %v1099
          %v1106 = vadd.f32 %v1093, %v1099
          %v1107 = vadd.f32 %v1094, %v1099
          %v1108 = vmax.f32 %v1047, %v1100
          %v1109 = vmax.f32 %v1048, %v1101
          %v1110 = vmax.f32 %v1049, %v1102
          %v1111 = vmax.f32 %v1050, %v1103
          %v1112 = vmax.f32 %v1051, %v1104
          %v1113 = vmax.f32 %v1052, %v1105
          %v1114 = vmax.f32 %v1053, %v1106
          %v1115 = vmax.f32 %v1054, %v1107
          %1116 = vset.pattern.permute.xlu0 14
          %1117 = vperm.xlu0 %1116, %v246
          %v1118 = vpop.permute.xlu0 %1117
          %1120 = vset.pattern.permute.xlu0 14
          %1121 = vperm.xlu0 %1120, %v247
          %v1122 = vpop.permute.xlu0 %1121
          %1124 = vset.pattern.permute.xlu0 14
          %1125 = vperm.xlu0 %1124, %v248
          %v1126 = vpop.permute.xlu0 %1125
          %1128 = vset.pattern.permute.xlu0 14
          %1129 = vperm.xlu0 %1128, %v249
          %v1130 = vpop.permute.xlu0 %1129
          %1132 = vset.pattern.permute.xlu0 14
          %1133 = vperm.xlu0 %1132, %v250
          %v1134 = vpop.permute.xlu0 %1133
          %1136 = vset.pattern.permute.xlu0 14
          %1137 = vperm.xlu0 %1136, %v251
          %v1138 = vpop.permute.xlu0 %1137
          %1140 = vset.pattern.permute.xlu0 14
          %1141 = vperm.xlu0 %1140, %v252
          %v1142 = vpop.permute.xlu0 %1141
          %1144 = vset.pattern.permute.xlu0 14
          %1145 = vperm.xlu0 %1144, %v253
          %v1146 = vpop.permute.xlu0 %1145
          %v1148 = vmul.f32 %v1118, %v231
          %v1149 = vmul.f32 %v1122, %v231
          %v1150 = vmul.f32 %v1126, %v231
          %v1151 = vmul.f32 %v1130, %v231
          %v1152 = vmul.f32 %v1134, %v231
          %v1153 = vmul.f32 %v1138, %v231
          %v1154 = vmul.f32 %v1142, %v231
          %v1155 = vmul.f32 %v1146, %v231
          %v1156 = vld [vmem:[%s2 + $0xe] sm:$0x1]
          %v1157 = vlaneseq
          %v1158 = vshrl.u32 %v1157, 7
          %v1159 = vsub.s32 0, %v1158
          %v1160 = vrot.slane %v1156, %v1159
          %v1161 = vadd.f32 %v1148, %v1160
          %v1162 = vadd.f32 %v1149, %v1160
          %v1163 = vadd.f32 %v1150, %v1160
          %v1164 = vadd.f32 %v1151, %v1160
          %v1165 = vadd.f32 %v1152, %v1160
          %v1166 = vadd.f32 %v1153, %v1160
          %v1167 = vadd.f32 %v1154, %v1160
          %v1168 = vadd.f32 %v1155, %v1160
          %v1169 = vmax.f32 %v1108, %v1161
          %v1170 = vmax.f32 %v1109, %v1162
          %v1171 = vmax.f32 %v1110, %v1163
          %v1172 = vmax.f32 %v1111, %v1164
          %v1173 = vmax.f32 %v1112, %v1165
          %v1174 = vmax.f32 %v1113, %v1166
          %v1175 = vmax.f32 %v1114, %v1167
          %v1176 = vmax.f32 %v1115, %v1168
          %1177 = vset.pattern.permute.xlu0 15
          %1178 = vperm.xlu0 %1177, %v246
          %v1179 = vpop.permute.xlu0 %1178
          %1181 = vset.pattern.permute.xlu0 15
          %1182 = vperm.xlu0 %1181, %v247
          %v1183 = vpop.permute.xlu0 %1182
          %1185 = vset.pattern.permute.xlu0 15
          %1186 = vperm.xlu0 %1185, %v248
          %v1187 = vpop.permute.xlu0 %1186
          %1189 = vset.pattern.permute.xlu0 15
          %1190 = vperm.xlu0 %1189, %v249
          %v1191 = vpop.permute.xlu0 %1190
          %1193 = vset.pattern.permute.xlu0 15
          %1194 = vperm.xlu0 %1193, %v250
          %v1195 = vpop.permute.xlu0 %1194
          %1197 = vset.pattern.permute.xlu0 15
          %1198 = vperm.xlu0 %1197, %v251
          %v1199 = vpop.permute.xlu0 %1198
          %1201 = vset.pattern.permute.xlu0 15
          %1202 = vperm.xlu0 %1201, %v252
          %v1203 = vpop.permute.xlu0 %1202
          %1205 = vset.pattern.permute.xlu0 15
          %1206 = vperm.xlu0 %1205, %v253
          %v1207 = vpop.permute.xlu0 %1206
          %v1209 = vmul.f32 %v1179, %v231
          %v1210 = vmul.f32 %v1183, %v231
          %v1211 = vmul.f32 %v1187, %v231
          %v1212 = vmul.f32 %v1191, %v231
          %v1213 = vmul.f32 %v1195, %v231
          %v1214 = vmul.f32 %v1199, %v231
          %v1215 = vmul.f32 %v1203, %v231
          %v1216 = vmul.f32 %v1207, %v231
          %v1217 = vld [vmem:[%s2 + $0xf] sm:$0x1]
          %v1218 = vlaneseq
          %v1219 = vshrl.u32 %v1218, 7
          %v1220 = vsub.s32 0, %v1219
          %v1221 = vrot.slane %v1217, %v1220
          %v1222 = vadd.f32 %v1209, %v1221
          %v1223 = vadd.f32 %v1210, %v1221
          %v1224 = vadd.f32 %v1211, %v1221
          %v1225 = vadd.f32 %v1212, %v1221
          %v1226 = vadd.f32 %v1213, %v1221
          %v1227 = vadd.f32 %v1214, %v1221
          %v1228 = vadd.f32 %v1215, %v1221
          %v1229 = vadd.f32 %v1216, %v1221
          %v1230 = vmax.f32 %v1169, %v1222
          %v1231 = vmax.f32 %v1170, %v1223
          %v1232 = vmax.f32 %v1171, %v1224
          %v1233 = vmax.f32 %v1172, %v1225
          %v1234 = vmax.f32 %v1173, %v1226
          %v1235 = vmax.f32 %v1174, %v1227
          %v1236 = vmax.f32 %v1175, %v1228
          %v1237 = vmax.f32 %v1176, %v1229
          %v1238 = vld [vmem:[%s3] sm:$0xff]
          %v1239 = vld [vmem:[%s3 + $0x8] sm:$0xff]
          %v1240 = vld [vmem:[%s3 + $0x10] sm:$0xff]
          %v1241 = vld [vmem:[%s3 + $0x18] sm:$0xff]
          %v1242 = vld [vmem:[%s3 + $0x20] sm:$0xff]
          %v1243 = vld [vmem:[%s3 + $0x28] sm:$0xff]
          %v1244 = vld [vmem:[%s3 + $0x30] sm:$0xff]
          %v1245 = vld [vmem:[%s3 + $0x38] sm:$0xff]
          %v1246 = vld [vmem:[%s3 + $0x40] sm:$0xff]
          %v1247 = vld [vmem:[%s3 + $0x48] sm:$0xff]
          %v1248 = vld [vmem:[%s3 + $0x50] sm:$0xff]
          %v1249 = vld [vmem:[%s3 + $0x58] sm:$0xff]
          %v1250 = vld [vmem:[%s3 + $0x60] sm:$0xff]
          %v1251 = vld [vmem:[%s3 + $0x68] sm:$0xff]
          %v1252 = vld [vmem:[%s3 + $0x70] sm:$0xff]
          %v1253 = vld [vmem:[%s3 + $0x78] sm:$0xff]
          %v1254 = vld [vmem:[%s4] sm:$0x1]
          %v1256 = vlaneseq
          %v1257 = vshrl.u32 %v1256, 7
          %v1258 = vsub.s32 0, %v1257
          %v1259 = vrot.slane %v1254, %v1258
          %1261 = vmatprep.subr.mxu0 0.0
          %1262 = vmatpush1.msra.mxu0 %v1238
          %1263 = vmatprep.subr.mxu0 0.0
          %1264 = vmatpush1.msra.mxu0 %v1239
          %1265 = vmatprep.subr.mxu0 0.0
          %1266 = vmatpush1.msra.mxu0 %v1240
          %1267 = vmatprep.subr.mxu0 0.0
          %1268 = vmatpush1.msra.mxu0 %v1241
          %1269 = vmatprep.subr.mxu0 0.0
          %1270 = vmatpush1.msra.mxu0 %v1242
          %1271 = vmatprep.subr.mxu0 0.0
          %1272 = vmatpush1.msra.mxu0 %v1243
          %1273 = vmatprep.subr.mxu0 0.0
          %1274 = vmatpush1.msra.mxu0 %v1244
          %1275 = vmatprep.subr.mxu0 0.0
          %1276 = vmatpush1.msra.mxu0 %v1245
          %1277 = vmatprep.subr.mxu0 0.0
          %1278 = vmatpush1.msra.mxu0 %v1246
          %1279 = vmatprep.subr.mxu0 0.0
          %1280 = vmatpush1.msra.mxu0 %v1247
          %1281 = vmatprep.subr.mxu0 0.0
          %1282 = vmatpush1.msra.mxu0 %v1248
          %1283 = vmatprep.subr.mxu0 0.0
          %1284 = vmatpush1.msra.mxu0 %v1249
          %1285 = vmatprep.subr.mxu0 0.0
          %1286 = vmatpush1.msra.mxu0 %v1250
          %1287 = vmatprep.subr.mxu0 0.0
          %1288 = vmatpush1.msra.mxu0 %v1251
          %1289 = vmatprep.subr.mxu0 0.0
          %1290 = vmatpush1.msra.mxu0 %v1252
          %1291 = vmatprep.subr.mxu0 0.0
          %1292 = vmatpush1.msra.mxu0 %v1253
          %1293 = vmatprep.subr.mxu0 0.0
          %1294 = vmatpush1.msra.mxu0 0.0
          %1295 = vmatprep.subr.mxu0 0.0
          %1296 = vmatpush1.msra.mxu0 0.0
          %1297 = vmatprep.subr.mxu0 0.0
          %1298 = vmatpush1.msra.mxu0 0.0
          %1299 = vmatprep.subr.mxu0 0.0
          %1300 = vmatpush1.msra.mxu0 0.0
          %1301 = vmatprep.subr.mxu0 0.0
          %1302 = vmatpush1.msra.mxu0 0.0
          %1303 = vmatprep.subr.mxu0 0.0
          %1304 = vmatpush1.msra.mxu0 0.0
          %1305 = vmatprep.subr.mxu0 0.0
          %1306 = vmatpush1.msra.mxu0 0.0
          %1307 = vmatprep.subr.mxu0 0.0
          %1308 = vmatpush1.msra.mxu0 0.0
          %1309 = vmatprep.subr.mxu0 0.0
          %1310 = vmatpush1.msra.mxu0 0.0
          %1311 = vmatprep.subr.mxu0 0.0
          %1312 = vmatpush1.msra.mxu0 0.0
          %1313 = vmatprep.subr.mxu0 0.0
          %1314 = vmatpush1.msra.mxu0 0.0
          %1315 = vmatprep.subr.mxu0 0.0
          %1316 = vmatpush1.msra.mxu0 0.0
          %1317 = vmatprep.subr.mxu0 0.0
          %1318 = vmatpush1.msra.mxu0 0.0
          %1319 = vmatprep.subr.mxu0 0.0
          %1320 = vmatpush1.msra.mxu0 0.0
          %1321 = vmatprep.subr.mxu0 0.0
          %1322 = vmatpush1.msra.mxu0 0.0
          %1323 = vmatprep.subr.mxu0 0.0
          %1324 = vmatpush1.msra.mxu0 0.0
          %1325 = vmatprep.mubr.f32.mxu0 0.0
          %1326 = vmatmul.mubr.f32.gmra.mrb[0].mxu0 %v1230
          %v1327 = vpop.f32.mrb[0].mxu0
          %v1328 = vadd.f32 %v1259, %v1327
          %v1329 = vpop.f32.mrb[0].mxu0
          %1330 = vmatprep.mubr.f32.mxu0 0.0
          %1331 = vmatmul.mubr.f32.gmra.mrb[0].mxu0 %v1231
          %v1332 = vpop.f32.mrb[0].mxu0
          %v1333 = vadd.f32 %v1259, %v1332
          %v1334 = vpop.f32.mrb[0].mxu0
          %1335 = vmatprep.mubr.f32.mxu0 0.0
          %1336 = vmatmul.mubr.f32.gmra.mrb[0].mxu0 %v1232
          %v1337 = vpop.f32.mrb[0].mxu0
          %v1338 = vadd.f32 %v1259, %v1337
          %v1339 = vpop.f32.mrb[0].mxu0
          %1340 = vmatprep.mubr.f32.mxu0 0.0
          %1341 = vmatmul.mubr.f32.gmra.mrb[0].mxu0 %v1233
          %v1342 = vpop.f32.mrb[0].mxu0
          %v1343 = vadd.f32 %v1259, %v1342
          %v1344 = vpop.f32.mrb[0].mxu0
          %1345 = vmatprep.mubr.f32.mxu0 0.0
          %1346 = vmatmul.mubr.f32.gmra.mrb[0].mxu0 %v1234
          %v1347 = vpop.f32.mrb[0].mxu0
          %v1348 = vadd.f32 %v1259, %v1347
          %v1349 = vpop.f32.mrb[0].mxu0
          %1350 = vmatprep.mubr.f32.mxu0 0.0
          %1351 = vmatmul.mubr.f32.gmra.mrb[0].mxu0 %v1235
          %v1352 = vpop.f32.mrb[0].mxu0
          %v1353 = vadd.f32 %v1259, %v1352
          %v1354 = vpop.f32.mrb[0].mxu0
          %1355 = vmatprep.mubr.f32.mxu0 0.0
          %1356 = vmatmul.mubr.f32.gmra.mrb[0].mxu0 %v1236
          %v1357 = vpop.f32.mrb[0].mxu0
          %v1358 = vadd.f32 %v1259, %v1357
          %v1359 = vpop.f32.mrb[0].mxu0
          %1360 = vmatprep.mubr.f32.mxu0 0.0
          %1361 = vmatmul.mubr.f32.gmra.mrb[0].mxu0 %v1237
          %v1362 = vpop.f32.mrb[0].mxu0
          %v1363 = vadd.f32 %v1259, %v1362
          %v1364 = vpop.f32.mrb[0].mxu0
          %1365 = vdwg.mxu0
          %s1366 = scalar_lea.vmem %s218, %s244 [#allocation2]
          %1367 = vst [vmem:[%s1366] sm:$0xff] %v1328
          %1368 = vst [vmem:[%s1366 + $0x8] sm:$0xff] %v1333
          %1369 = vst [vmem:[%s1366 + $0x10] sm:$0xff] %v1338
          %1370 = vst [vmem:[%s1366 + $0x18] sm:$0xff] %v1343
          %1371 = vst [vmem:[%s1366 + $0x20] sm:$0xff] %v1348
          %1372 = vst [vmem:[%s1366 + $0x28] sm:$0xff] %v1353
          %1373 = vst [vmem:[%s1366 + $0x30] sm:$0xff] %v1358
          %1374 = vst [vmem:[%s1366 + $0x38] sm:$0xff] %v1363
        $region45: #{tpu_custom_call.1} parent=39 // loop_footer
          %s243 = sadd.s32 1, %s239
        $region46: #{tpu_custom_call.1} parent=39 // loop_footer_branch
          %238 = sbr.rel target = $region42
        $region47: #{tpu_custom_call.1} parent=39 // loop_exit
          _
        %s1375 = sand.u32 %s137, 1
        %s1376 = scalar_lea.sflag [#allocation3], %s1375
        %s1377 = sand.u32 %s137, 1
        %s1378 = smul.addr %s1377, 128
        %s1379 = scalar_lea.vmem [#allocation2], %s1378
        // Predicated region
        $region48: #{tpu_custom_call.1} parent=39 // pred_check
          %p1380 = pneg %p147
        $region49: #{tpu_custom_call.1} parent=39 // pred_check_branch
          %1382 = sbr.rel (%p1380) target = $region51
        $region50: #{tpu_custom_call.1} parent=39 // pred_region
          %s1383 = smul.u32 16, %s19
          %s1385 = ssub.s32 2048, 2048
          %1386 = vsyncadd %s1376, %s1385
          %s1387 = smul.addr %s1383, 128
          %s1388 = scalar_lea.hbm %s5, %s1387
          %s1389 = sshll.u32 %s1379, 4
          %s1390 = int_to_ptr.vmem [resolvable:$true] %s1389
          %1395 = dma.vmem_to_hbm [thread:$0]  %s1390, 2048, %s1388, %s1376, 128, 128, 8
        $region51: #{tpu_custom_call.1} parent=39 // pred_fallthru
          _
      $region40: #{tpu_custom_call.1} parent=5 // pred_fallthru
        _
      %p1396 = scmp.le.s32.totalorder 2, %s14
      // Predicated region
      $region52: #{tpu_custom_call.1} parent=5 // pred_check
        %p1397 = pneg %p1396
      $region53: #{tpu_custom_call.1} parent=5 // pred_check_branch
        %1399 = sbr.rel (%p1397) target = $region55
      $region54: #{tpu_custom_call.1} parent=5 // pred_region
        %s1400 = ssub.s32 %s14, 2
        // Predicated region
        $region56: #{tpu_custom_call.1} parent=54 // pred_check
          %p1401 = pneg %p153
        $region57: #{tpu_custom_call.1} parent=54 // pred_check_branch
          %1403 = sbr.rel (%p1401) target = $region59
        $region58: #{tpu_custom_call.1} parent=54 // pred_region
          %s1404 = sand.u32 %s138, 1
          %s1405 = scalar_lea.sflag [#allocation3], %s1404
          %s1406 = sand.u32 %s138, 1
          %s1407 = smul.addr %s1406, 128
          %s1408 = scalar_lea.vmem [#allocation2], %s1407
          %1409 = dma.done %s1405, 2048
        $region59: #{tpu_custom_call.1} parent=54 // pred_fallthru
          _
      $region55: #{tpu_custom_call.1} parent=5 // pred_fallthru
        _
    $region6: #{tpu_custom_call.1} parent=1 // loop_footer
      %s18 = sadd.s32 1, %s14
    $region7: #{tpu_custom_call.1} parent=1 // loop_footer_branch
      %13 = sbr.rel target = $region3
    $region8: #{tpu_custom_call.1} parent=1 // loop_exit
      _
    %1410 = vsyncpa [#allocation3], 1
    %s1411 = scalar_lea.sflag [#allocation3], 1
    %1412 = vsyncpa %s1411, 1

</llo_original>
